<compile_context>
chip_gen: v7x
topology: tpu7x:2x2x1
jax: 0.10.0
libtpu: 0.0.40
codegen_flags: <defaults>
</compile_context>

<pallas_src>
import functools
import math

import jax
import jax.numpy as jnp
from jax.experimental import pallas as pl
from jax.experimental.pallas import tpu as pltpu


# Tile / budget preferences.
_TM_PREF = 256                         # row tile for linear / layernorm grids
_TK_PREF = 256                         # K tile for the streamed-weight fallback (>=256 per v6e review)
_VMEM_LIMIT = 48 * 1024 * 1024         # <= ~48 MiB so tiling also fits v7x's 64 MiB VMEM
_RESIDENT_W_BYTES = 12 * 1024 * 1024   # weights below this stay resident in VMEM (ALBERT-base FFN = 4.7 MB)


def _row_tile(n, pref=_TM_PREF):
    """Largest row tile <= pref that divides n (never silently falls back to huge tiles)."""
    if n <= pref:
        return n
    if n % pref == 0:
        return pref
    for t in range(pref, 0, -1):       # largest divisor <= pref keeps blocks pipelineable
        if n % t == 0:
            return t
    return n


def _k_tile(k, pref=_TK_PREF):
    if k % pref == 0:
        return pref
    if k % 128 == 0:
        return 128
    return k


# ----------------- fused linear (+act +residual +LN), resident-weight path -----------------

def _fused_linear_resident_kernel(*args, activation, has_residual, has_ln, eps):
    idx = 0
    x_ref = args[idx]; idx += 1          # (tm, K)  bf16
    w_ref = args[idx]; idx += 1          # (K, M)   bf16, resident across the whole grid
    b_ref = args[idx]; idx += 1          # (1, M)   f32
    res_ref = None
    if has_residual:
        res_ref = args[idx]; idx += 1    # (tm, M)
    g_ref = beta_ref = None
    if has_ln:
        g_ref = args[idx]; beta_ref = args[idx + 1]; idx += 2   # (1, M) f32 each
    o_ref = args[idx]                    # (tm, M)

    # Full-K matmul in one MXU call: no VMEM accumulator scratch, no cross-step RMW.
    y = jnp.dot(x_ref[...], w_ref[...], preferred_element_type=jnp.float32) + b_ref[...]
    if activation == "tanh":
        y = jnp.tanh(y)
    elif activation == "gelu":
        y = jax.nn.gelu(y)               # tanh-approx == ALBERT "gelu_new"
    if has_residual:
        y = y + res_ref[...].astype(jnp.float32)
    if has_ln:
        mu = jnp.mean(y, axis=-1, keepdims=True)
        var = jnp.mean((y - mu) ** 2, axis=-1, keepdims=True)
        y = (y - mu) * jax.lax.rsqrt(var + eps)
        y = y * g_ref[...] + beta_ref[...]
    o_ref[...] = y.astype(o_ref.dtype)


# ------------- fused linear, streamed-weight (K-tiled) fallback for huge weights ----------

def _fused_linear_streamed_kernel(*args, activation, has_residual, has_ln, eps):
    idx = 0
    x_ref = args[idx]; idx += 1          # (tm, tk) bf16
    w_ref = args[idx]; idx += 1          # (tk, M)  bf16
    b_ref = args[idx]; idx += 1          # (1, M)   f32
    res_ref = None
    if has_residual:
        res_ref = args[idx]; idx += 1
    g_ref = beta_ref = None
    if has_ln:
        g_ref = args[idx]; beta_ref = args[idx + 1]; idx += 2
    o_ref = args[idx]
    acc_ref = args[idx + 1]              # (tm, M) f32 scratch

    k_idx = pl.program_id(1)

    @pl.when(k_idx == 0)
    def _init():
        acc_ref[...] = jnp.zeros_like(acc_ref)

    acc_ref[...] += jnp.dot(x_ref[...], w_ref[...],
                            preferred_element_type=jnp.float32)

    @pl.when(k_idx == pl.num_programs(1) - 1)
    def _finish():
        y = acc_ref[...] + b_ref[...]
        if activation == "tanh":
            y = jnp.tanh(y)
        elif activation == "gelu":
            y = jax.nn.gelu(y)
        if has_residual:
            y = y + res_ref[...].astype(jnp.float32)
        if has_ln:
            mu = jnp.mean(y, axis=-1, keepdims=True)
            var = jnp.mean((y - mu) ** 2, axis=-1, keepdims=True)
            y = (y - mu) * jax.lax.rsqrt(var + eps)
            y = y * g_ref[...] + beta_ref[...]
        o_ref[...] = y.astype(o_ref.dtype)


def fused_linear(x, w, b, *, residual=None, ln=None, activation=None,
                 out_dtype=jnp.bfloat16, eps=1e-12):
    """y = act(x @ w + b) [+ residual] [-> layernorm].  x, w in bf16; epilogue in f32."""
    N, K = x.shape
    M = w.shape[1]
    tm = _row_tile(N)
    has_ln = ln is not None
    has_res = residual is not None

    args = [x, w, b.reshape(1, M)]
    extra_specs_resident = []
    extra_specs_streamed = []
    if has_res:
        args.append(residual)
        extra_specs_resident.append(pl.BlockSpec((tm, M), lambda i: (i, 0)))
        extra_specs_streamed.append(pl.BlockSpec((tm, M), lambda i, k: (i, 0)))
    if has_ln:
        gamma, beta = ln
        args += [gamma.reshape(1, M), beta.reshape(1, M)]
        extra_specs_resident += [pl.BlockSpec((1, M), lambda i: (0, 0))] * 2
        extra_specs_streamed += [pl.BlockSpec((1, M), lambda i, k: (0, 0))] * 2

    w_bytes = K * M * jnp.dtype(w.dtype).itemsize
    if w_bytes <= _RESIDENT_W_BYTES:
        # Primary path: weight resident in VMEM (constant index_map -> DMA'd once).
        kernel = functools.partial(
            _fused_linear_resident_kernel, activation=activation,
            has_residual=has_res, has_ln=has_ln, eps=eps)
        in_specs = [
            pl.BlockSpec((tm, K), lambda i: (i, 0)),
            pl.BlockSpec((K, M), lambda i: (0, 0)),     # resident weight
            pl.BlockSpec((1, M), lambda i: (0, 0)),
        ] + extra_specs_resident
        return pl.pallas_call(
            kernel,
            out_shape=jax.ShapeDtypeStruct((N, M), out_dtype),
            grid=(N // tm,),
            in_specs=in_specs,
            out_specs=pl.BlockSpec((tm, M), lambda i: (i, 0)),
            compiler_params=pltpu.CompilerParams(
                dimension_semantics=("parallel",),
                vmem_limit_bytes=_VMEM_LIMIT),
        )(*args)

    # Fallback for weights too big to hold resident (e.g. ALBERT-xxlarge FFN): K-tiled.
    # TODO(synk): epilogue-only inputs (bias/residual/gamma/beta) could use pl.Buffered(1).
    tk = _k_tile(K)
    kernel = functools.partial(
        _fused_linear_streamed_kernel, activation=activation,
        has_residual=has_res, has_ln=has_ln, eps=eps)
    in_specs = [
        pl.BlockSpec((tm, tk), lambda i, k: (i, k)),
        pl.BlockSpec((tk, M), lambda i, k: (k, 0)),
        pl.BlockSpec((1, M), lambda i, k: (0, 0)),
    ] + extra_specs_streamed
    return pl.pallas_call(
        kernel,
        out_shape=jax.ShapeDtypeStruct((N, M), out_dtype),
        grid=(N // tm, K // tk),
        in_specs=in_specs,
        out_specs=pl.BlockSpec((tm, M), lambda i, k: (i, 0)),
        scratch_shapes=[pltpu.VMEM((tm, M), jnp.float32)],
        compiler_params=pltpu.CompilerParams(
            dimension_semantics=("parallel", "arbitrary"),
            vmem_limit_bytes=_VMEM_LIMIT),
    )(*args)


# -------------------------------- layer norm ---------------------------------------

def _layernorm_kernel(x_ref, g_ref, b_ref, o_ref, *, eps):
    x = x_ref[...].astype(jnp.float32)
    mu = jnp.mean(x, axis=-1, keepdims=True)
    var = jnp.mean((x - mu) ** 2, axis=-1, keepdims=True)
    xn = (x - mu) * jax.lax.rsqrt(var + eps)
    o_ref[...] = (xn * g_ref[...] + b_ref[...]).astype(o_ref.dtype)


def layer_norm(x, gamma, beta, *, eps=1e-12, out_dtype=jnp.bfloat16):
    N, H = x.shape
    tm = _row_tile(N)
    return pl.pallas_call(
        functools.partial(_layernorm_kernel, eps=eps),
        out_shape=jax.ShapeDtypeStruct((N, H), out_dtype),
        grid=(N // tm,),
        in_specs=[
            pl.BlockSpec((tm, H), lambda i: (i, 0)),
            pl.BlockSpec((1, H), lambda i: (0, 0)),
            pl.BlockSpec((1, H), lambda i: (0, 0)),
        ],
        out_specs=pl.BlockSpec((tm, H), lambda i: (i, 0)),
        compiler_params=pltpu.CompilerParams(
            dimension_semantics=("parallel",),
            vmem_limit_bytes=_VMEM_LIMIT),
    )(x, gamma.reshape(1, H), beta.reshape(1, H))


# ------------------------------- attention -----------------------------------------
# Consumes the fused QKV activation as a lane-aligned [B, S, 3H] slab (no XLA splits /
# head transposes).  Grid = (batch, head_group); Q/K/V slices for one head group come
# directly from BlockSpec index_maps on the same array.  The 1/sqrt(dH) scale is already
# folded into W_q, so no per-step q scaling.  Context is written back lane-dense [B,S,H].

def _attention_kernel(q_ref, k_ref, v_ref, m_ref, o_ref, *, heads_per_group, head_dim):
    dH = head_dim
    q = q_ref[0]                         # (S, hg*dH) bf16, scale pre-folded into W_q
    k = k_ref[0]
    v = v_ref[0]
    mask = m_ref[0]                      # (1, S) additive f32
    ctxs = []
    for h in range(heads_per_group):     # static unroll; 2-4 heads per group
        qh = q[:, h * dH:(h + 1) * dH]
        kh = k[:, h * dH:(h + 1) * dH]
        vh = v[:, h * dH:(h + 1) * dH]
        # scores = qh @ kh.T via dot_general (no explicit transpose / relayout)
        s = jax.lax.dot_general(qh, kh, (((1,), (1,)), ((), ())),
                                preferred_element_type=jnp.float32)   # (S, S)
        s = s + mask
        s = s - jnp.max(s, axis=-1, keepdims=True)
        p = jnp.exp(s)
        denom = jnp.sum(p, axis=-1, keepdims=True)                    # (S, 1)
        ctx = jnp.dot(p.astype(vh.dtype), vh,
                      preferred_element_type=jnp.float32)             # (S, dH)
        # normalize AFTER PV: scales (S,dH), not (S,S); EUP reciprocal is ~free.
        ctxs.append(ctx * pl.reciprocal(denom, approx=True))
    # merge heads into a lane-dense (S, hg*dH) slab before the store
    o_ref[0] = jnp.concatenate(ctxs, axis=-1).astype(o_ref.dtype)


def multi_head_attention(qkv, add_mask, *, num_heads, head_dim):
    """qkv: [B, S, 3H] bf16 (Q|K|V along lanes); add_mask: [B, 1, S] f32 -> ctx [B, S, H]."""
    B, S, threeH = qkv.shape
    H = num_heads * head_dim
    assert threeH == 3 * H

    # smallest head group whose lane width is a multiple of 128 (ALBERT-base: 2 heads = 128)
    hpg = num_heads
    for cand in range(1, num_heads + 1):
        if num_heads % cand == 0 and (cand * head_dim) % 128 == 0:
            hpg = cand
            break
    gd = hpg * head_dim
    n_groups = num_heads // hpg

    q_spec = pl.BlockSpec((1, S, gd), lambda b, g: (b, 0, g))
    k_spec = pl.BlockSpec((1, S, gd), lambda b, g: (b, 0, n_groups + g))
    v_spec = pl.BlockSpec((1, S, gd), lambda b, g: (b, 0, 2 * n_groups + g))
    m_spec = pl.BlockSpec((1, 1, S), lambda b, g: (b, 0, 0))

    return pl.pallas_call(
        functools.partial(_attention_kernel, heads_per_group=hpg, head_dim=head_dim),
        out_shape=jax.ShapeDtypeStruct((B, S, H), qkv.dtype),
        grid=(B, n_groups),
        in_specs=[q_spec, k_spec, v_spec, m_spec],
        out_specs=pl.BlockSpec((1, S, gd), lambda b, g: (b, 0, g)),
        compiler_params=pltpu.CompilerParams(
            dimension_semantics=("parallel", "parallel"),
            vmem_limit_bytes=_VMEM_LIMIT),
    )(qkv, qkv, qkv, add_mask)


# --------------------------- model (glue in JAX) ------------------------------------

class Config:
    vocab = 100
    type_vocab = 2
    max_pos = 16
    hidden = 128          # small stand-in for ALBERT's 768 (kept a multiple of 128)
    heads = 4
    head_dim = 32         # heads * head_dim == hidden
    intermediate = 256
    layers = 2


def init_params(key, cfg):
    def dense(k, fan_in, fan_out):
        w = (0.02 * jax.random.normal(k, (fan_in, fan_out), jnp.float32)
             ).astype(jnp.bfloat16)                         # weights stored bf16 for the MXU
        b = jnp.zeros((fan_out,), jnp.float32)
        return {"w": w, "b": b}

    H, I = cfg.hidden, cfg.intermediate
    scale = 1.0 / math.sqrt(cfg.head_dim)
    keys = jax.random.split(key, 6 + cfg.layers)
    p = {
        "word_emb": 0.02 * jax.random.normal(keys[0], (cfg.vocab, H), jnp.float32),
        "pos_emb": 0.02 * jax.random.normal(keys[1], (cfg.max_pos, H), jnp.float32),
        "type_emb": 0.02 * jax.random.normal(keys[2], (cfg.type_vocab, H), jnp.float32),
        "emb_ln_g": jnp.ones((H,), jnp.float32),
        "emb_ln_b": jnp.zeros((H,), jnp.float32),
        "pooler": dense(keys[3], H, H),
        "cls_w": 0.02 * jax.random.normal(keys[4], (H, 1), jnp.float32),  # plain-JAX head
        "cls_b": jnp.zeros((1,), jnp.float32),
        "layers": [],
    }
    for li in range(cfg.layers):
        lk = jax.random.split(keys[6 + li], 4)
        qkv = dense(lk[0], H, 3 * H)                       # fused W_q|W_k|W_v
        # fold the attention scale 1/sqrt(dH) into the Q slice of W_qkv / b_qkv.
        # (when converting a real checkpoint, apply the same fold to W_q, b_q.)
        qkv["w"] = qkv["w"].at[:, :H].multiply(scale)
        qkv["b"] = qkv["b"].at[:H].multiply(scale)
        p["layers"].append({
            "qkv": qkv,
            "o": dense(lk[1], H, H),
            "attn_ln_g": jnp.ones((H,), jnp.float32),
            "attn_ln_b": jnp.zeros((H,), jnp.float32),
            "ffn_in": dense(lk[2], H, I),
            "ffn_out": dense(lk[3], I, H),
            "ffn_ln_g": jnp.ones((H,), jnp.float32),
            "ffn_ln_b": jnp.zeros((H,), jnp.float32),
        })
    return p


def sentence_pair_classifier_forward(params, cfg, input_ids, attn_masks, token_type_ids):
    B, S = input_ids.shape
    H, nH, dH = cfg.hidden, cfg.heads, cfg.head_dim
    N = B * S

    # ---- embeddings (gathers = glue) + Pallas layernorm; hidden states kept in bf16 ----
    positions = jnp.arange(S, dtype=jnp.int32)
    emb = (jnp.take(params["word_emb"], input_ids, axis=0)
           + jnp.take(params["pos_emb"], positions, axis=0)[None, :, :]
           + jnp.take(params["type_emb"], token_type_ids, axis=0))
    hs = layer_norm(emb.reshape(N, H), params["emb_ln_g"], params["emb_ln_b"])   # [N, H] bf16

    # additive attention mask, BERT-style: 0 keep, -10000 pad -> [B, 1, S]
    add_mask = ((1.0 - attn_masks.astype(jnp.float32)) * -10000.0).reshape(B, 1, S)

    for lp in params["layers"]:
        # fused QKV projection: one read of hs, one kernel, 3H-wide lane-dense output.
        qkv = fused_linear(hs, lp["qkv"]["w"], lp["qkv"]["b"])                   # [N, 3H]
        # attention consumes the [B,S,3H] slab directly; head split/merge is in-kernel.
        ctx = multi_head_attention(qkv.reshape(B, S, 3 * H), add_mask,
                                   num_heads=nH, head_dim=dH)                    # [B, S, H]
        # output projection fused with residual add + layernorm (no HBM round-trip)
        hs = fused_linear(ctx.reshape(N, H), lp["o"]["w"], lp["o"]["b"],
                          residual=hs, ln=(lp["attn_ln_g"], lp["attn_ln_b"]))
        # FFN: gelu matmul, then second matmul fused with residual + layernorm
        ff = fused_linear(hs, lp["ffn_in"]["w"], lp["ffn_in"]["b"], activation="gelu")
        hs = fused_linear(ff, lp["ffn_out"]["w"], lp["ffn_out"]["b"],
                          residual=hs, ln=(lp["ffn_ln_g"], lp["ffn_ln_b"]))

    # ---- pooler: tanh(W @ h_[CLS] + b) — reuses the fused linear kernel ----
    cls_tok = hs.reshape(B, S, H)[:, 0, :]                                       # [B, H]
    pooler_output = fused_linear(cls_tok, params["pooler"]["w"], params["pooler"]["b"],
                                 activation="tanh", out_dtype=jnp.float32)       # [B, H] f32

    # ---- classification head: Linear(hidden, 1) in plain JAX (1-wide lane output) ----
    # dropout(p=0.1) is identity at inference.
    logits = pooler_output @ params["cls_w"] + params["cls_b"]                   # [B, 1] f32
    return logits


# --------------------------------- driver -------------------------------------------

if __name__ == "__main__":
    cfg = Config()
    B, S = 2, 8

    key = jax.random.PRNGKey(0)
    k_param, k_ids = jax.random.split(key)

    params = init_params(k_param, cfg)

    input_ids = jax.random.randint(k_ids, (B, S), 0, cfg.vocab, dtype=jnp.int32)
    attn_masks = jnp.array([[1, 1, 1, 1, 1, 1, 0, 0],
                            [1, 1, 1, 1, 1, 1, 1, 1]], dtype=jnp.int32)
    token_type_ids = jnp.array([[0, 0, 0, 1, 1, 1, 0, 0],
                                [0, 0, 0, 0, 1, 1, 1, 1]], dtype=jnp.int32)

    fwd = jax.jit(lambda ids, m, tt: sentence_pair_classifier_forward(params, cfg, ids, m, tt))
    logits = jax.block_until_ready(fwd(input_ids, attn_masks, token_type_ids))

    assert logits.shape == (B, 1) and logits.dtype == jnp.float32
    assert bool(jnp.all(jnp.isfinite(logits)))
    print("KERNEL_OK")
</pallas_src>

<mosaic_0001>
module attributes {stable_mosaic.version = 11 : i64} {
  func.func @_layernorm_kernel(%arg0: i32, %arg1: memref<16x128xf32, #tpu.memory_space<vmem>>, %arg2: memref<1x128xf32, #tpu.memory_space<vmem>>, %arg3: memref<1x128xf32, #tpu.memory_space<vmem>>, %arg4: memref<16x128xbf16, #tpu.memory_space<vmem>>) attributes {dimension_semantics = [#tpu.dimension_semantics<parallel>], iteration_bounds = array<i64: 1>, scalar_prefetch = 0 : i64, scratch_operands = 0 : i64, tpu.core_type = #tpu.core_type<tc>, window_params = [{transform_indices = @transform_0, window_bounds = array<i64: 16, 128>}, {pipeline_mode = #tpu.pipeline_mode<synchronous>, transform_indices = @transform_1, window_bounds = array<i64: 1, 128>}, {pipeline_mode = #tpu.pipeline_mode<synchronous>, transform_indices = @transform_2, window_bounds = array<i64: 1, 128>}, {transform_indices = @transform_3, window_bounds = array<i64: 16, 128>}]} {
    %c0 = arith.constant 0 : index
    %c0_0 = arith.constant 0 : index
    %0 = vector.load %arg1[%c0, %c0_0] : memref<16x128xf32, #tpu.memory_space<vmem>>, vector<16x128xf32>
    %cst = arith.constant dense<0.000000e+00> : vector<16xf32>
    %1 = vector.multi_reduction <add>, %0, %cst [1] : vector<16x128xf32> to vector<16xf32>
    %2 = vector.shape_cast %1 : vector<16xf32> to vector<16x1xf32>
    %cst_1 = arith.constant 1.280000e+02 : f32
    %3 = vector.broadcast %cst_1 : f32 to vector<16x1xf32>
    %4 = arith.divf %2, %3 : vector<16x1xf32>
    %5 = vector.broadcast %4 : vector<16x1xf32> to vector<16x128xf32>
    %6 = arith.subf %0, %5 : vector<16x128xf32>
    %7 = arith.mulf %6, %6 : vector<16x128xf32>
    %cst_2 = arith.constant dense<0.000000e+00> : vector<16xf32>
    %8 = vector.multi_reduction <add>, %7, %cst_2 [1] : vector<16x128xf32> to vector<16xf32>
    %9 = vector.shape_cast %8 : vector<16xf32> to vector<16x1xf32>
    %cst_3 = arith.constant 1.280000e+02 : f32
    %10 = vector.broadcast %cst_3 : f32 to vector<16x1xf32>
    %11 = arith.divf %9, %10 : vector<16x1xf32>
    %12 = vector.broadcast %4 : vector<16x1xf32> to vector<16x128xf32>
    %13 = arith.subf %0, %12 : vector<16x128xf32>
    %cst_4 = arith.constant 9.99999996E-13 : f32
    %14 = vector.broadcast %cst_4 : f32 to vector<16x1xf32>
    %15 = arith.addf %11, %14 : vector<16x1xf32>
    %16 = math.rsqrt %15 : vector<16x1xf32>
    %17 = vector.broadcast %16 : vector<16x1xf32> to vector<16x128xf32>
    %18 = arith.mulf %13, %17 : vector<16x128xf32>
    %c0_5 = arith.constant 0 : index
    %c0_6 = arith.constant 0 : index
    %19 = vector.load %arg2[%c0_5, %c0_6] : memref<1x128xf32, #tpu.memory_space<vmem>>, vector<1x128xf32>
    %20 = vector.broadcast %19 : vector<1x128xf32> to vector<16x128xf32>
    %21 = arith.mulf %18, %20 : vector<16x128xf32>
    %c0_7 = arith.constant 0 : index
    %c0_8 = arith.constant 0 : index
    %22 = vector.load %arg3[%c0_7, %c0_8] : memref<1x128xf32, #tpu.memory_space<vmem>>, vector<1x128xf32>
    %23 = vector.broadcast %22 : vector<1x128xf32> to vector<16x128xf32>
    %24 = arith.addf %21, %23 : vector<16x128xf32>
    %25 = arith.truncf %24 : vector<16x128xf32> to vector<16x128xbf16>
    %c0_9 = arith.constant 0 : index
    %c0_10 = arith.constant 0 : index
    %26 = vector.load %arg4[%c0_9, %c0_10] : memref<16x128xbf16, #tpu.memory_space<vmem>>, vector<16x128xbf16>
    tpu.vector_store %arg4[%c0_9, %c0_10], %25 {strides = array<i32>} : memref<16x128xbf16, #tpu.memory_space<vmem>>, vector<16x128xbf16>,
    return
  }
  func.func @transform_0(%arg0: i32) -> (i32, i32) {
    %c0_i32 = arith.constant 0 : i32
    %c0_i32_0 = arith.constant 0 : i32
    return %arg0, %c0_i32 : i32, i32
  }
  func.func @transform_1(%arg0: i32) -> (i32, i32) {
    %c0_i32 = arith.constant 0 : i32
    %c0_i32_0 = arith.constant 0 : i32
    %c0_i32_1 = arith.constant 0 : i32
    return %c0_i32, %c0_i32_0 : i32, i32
  }
  func.func @transform_2(%arg0: i32) -> (i32, i32) {
    %c0_i32 = arith.constant 0 : i32
    %c0_i32_0 = arith.constant 0 : i32
    %c0_i32_1 = arith.constant 0 : i32
    return %c0_i32, %c0_i32_0 : i32, i32
  }
  func.func @transform_3(%arg0: i32) -> (i32, i32) {
    %c0_i32 = arith.constant 0 : i32
    %c0_i32_0 = arith.constant 0 : i32
    return %arg0, %c0_i32 : i32, i32
  }
}

module attributes {stable_mosaic.version = 11 : i64} {
  func.func @_fused_linear_resident_kernel(%arg0: i32, %arg1: memref<16x128xbf16, #tpu.memory_space<vmem>>, %arg2: memref<128x384xbf16, #tpu.memory_space<vmem>>, %arg3: memref<1x384xf32, #tpu.memory_space<vmem>>, %arg4: memref<16x384xbf16, #tpu.memory_space<vmem>>) attributes {dimension_semantics = [#tpu.dimension_semantics<parallel>], iteration_bounds = array<i64: 1>, scalar_prefetch = 0 : i64, scratch_operands = 0 : i64, tpu.core_type = #tpu.core_type<tc>, window_params = [{transform_indices = @transform_0, window_bounds = array<i64: 16, 128>}, {pipeline_mode = #tpu.pipeline_mode<synchronous>, transform_indices = @transform_1, window_bounds = array<i64: 128, 384>}, {pipeline_mode = #tpu.pipeline_mode<synchronous>, transform_indices = @transform_2, window_bounds = array<i64: 1, 384>}, {transform_indices = @transform_3, window_bounds = array<i64: 16, 384>}]} {
    %c0 = arith.constant 0 : index
    %c0_0 = arith.constant 0 : index
    %0 = vector.load %arg1[%c0, %c0_0] : memref<16x128xbf16, #tpu.memory_space<vmem>>, vector<16x128xbf16>
    %c0_1 = arith.constant 0 : index
    %c0_2 = arith.constant 0 : index
    %1 = vector.load %arg2[%c0_1, %c0_2] : memref<128x384xbf16, #tpu.memory_space<vmem>>, vector<128x384xbf16>
    %cst = arith.constant dense<0.000000e+00> : vector<16x384xf32>
    %2 = tpu.matmul %0, %1, %cst {dimension_numbers = #tpu.dot_dimension_numbers<[1], [0], [0], [1], [0, 0, 1, 1], [], []>} : vector<16x128xbf16>, vector<128x384xbf16>, vector<16x384xf32> -> vector<16x384xf32>
    %c0_3 = arith.constant 0 : index
    %c0_4 = arith.constant 0 : index
    %3 = vector.load %arg3[%c0_3, %c0_4] : memref<1x384xf32, #tpu.memory_space<vmem>>, vector<1x384xf32>
    %4 = vector.broadcast %3 : vector<1x384xf32> to vector<16x384xf32>
    %5 = arith.addf %2, %4 : vector<16x384xf32>
    %6 = arith.truncf %5 : vector<16x384xf32> to vector<16x384xbf16>
    %c0_5 = arith.constant 0 : index
    %c0_6 = arith.constant 0 : index
    %7 = vector.load %arg4[%c0_5, %c0_6] : memref<16x384xbf16, #tpu.memory_space<vmem>>, vector<16x384xbf16>
    tpu.vector_store %arg4[%c0_5, %c0_6], %6 {strides = array<i32>} : memref<16x384xbf16, #tpu.memory_space<vmem>>, vector<16x384xbf16>,
    return
  }
  func.func @transform_0(%arg0: i32) -> (i32, i32) {
    %c0_i32 = arith.constant 0 : i32
    %c0_i32_0 = arith.constant 0 : i32
    return %arg0, %c0_i32 : i32, i32
  }
  func.func @transform_1(%arg0: i32) -> (i32, i32) {
    %c0_i32 = arith.constant 0 : i32
    %c0_i32_0 = arith.constant 0 : i32
    %c0_i32_1 = arith.constant 0 : i32
    return %c0_i32, %c0_i32_0 : i32, i32
  }
  func.func @transform_2(%arg0: i32) -> (i32, i32) {
    %c0_i32 = arith.constant 0 : i32
    %c0_i32_0 = arith.constant 0 : i32
    %c0_i32_1 = arith.constant 0 : i32
    return %c0_i32, %c0_i32_0 : i32, i32
  }
  func.func @transform_3(%arg0: i32) -> (i32, i32) {
    %c0_i32 = arith.constant 0 : i32
    %c0_i32_0 = arith.constant 0 : i32
    return %arg0, %c0_i32 : i32, i32
  }
}

module attributes {stable_mosaic.version = 11 : i64} {
  func.func @_attention_kernel(%arg0: i32, %arg1: i32, %arg2: memref<1x8x128xbf16, #tpu.memory_space<vmem>>, %arg3: memref<1x8x128xbf16, #tpu.memory_space<vmem>>, %arg4: memref<1x8x128xbf16, #tpu.memory_space<vmem>>, %arg5: memref<1x1x8xf32, #tpu.memory_space<vmem>>, %arg6: memref<1x8x128xbf16, #tpu.memory_space<vmem>>) attributes {dimension_semantics = [#tpu.dimension_semantics<parallel>, #tpu.dimension_semantics<parallel>], iteration_bounds = array<i64: 2, 1>, scalar_prefetch = 0 : i64, scratch_operands = 0 : i64, tpu.core_type = #tpu.core_type<tc>, window_params = [{transform_indices = @transform_0, window_bounds = array<i64: 1, 8, 128>}, {transform_indices = @transform_1, window_bounds = array<i64: 1, 8, 128>}, {transform_indices = @transform_2, window_bounds = array<i64: 1, 8, 128>}, {transform_indices = @transform_3, window_bounds = array<i64: 1, 1, 8>}, {transform_indices = @transform_4, window_bounds = array<i64: 1, 8, 128>}]} {
    %c0 = arith.constant 0 : index
    %c0_0 = arith.constant 0 : index
    %c0_1 = arith.constant 0 : index
    %0 = vector.load %arg2[%c0, %c0_0, %c0_1] : memref<1x8x128xbf16, #tpu.memory_space<vmem>>, vector<1x8x128xbf16>
    %1 = vector.shape_cast %0 : vector<1x8x128xbf16> to vector<8x128xbf16>
    %c0_2 = arith.constant 0 : index
    %c0_3 = arith.constant 0 : index
    %c0_4 = arith.constant 0 : index
    %2 = vector.load %arg3[%c0_2, %c0_3, %c0_4] : memref<1x8x128xbf16, #tpu.memory_space<vmem>>, vector<1x8x128xbf16>
    %3 = vector.shape_cast %2 : vector<1x8x128xbf16> to vector<8x128xbf16>
    %c0_5 = arith.constant 0 : index
    %c0_6 = arith.constant 0 : index
    %c0_7 = arith.constant 0 : index
    %4 = vector.load %arg4[%c0_5, %c0_6, %c0_7] : memref<1x8x128xbf16, #tpu.memory_space<vmem>>, vector<1x8x128xbf16>
    %5 = vector.shape_cast %4 : vector<1x8x128xbf16> to vector<8x128xbf16>
    %c0_8 = arith.constant 0 : index
    %c0_9 = arith.constant 0 : index
    %c0_10 = arith.constant 0 : index
    %6 = vector.load %arg5[%c0_8, %c0_9, %c0_10] : memref<1x1x8xf32, #tpu.memory_space<vmem>>, vector<1x1x8xf32>
    %7 = vector.shape_cast %6 : vector<1x1x8xf32> to vector<1x8xf32>
    %8 = vector.extract_strided_slice %1 {offsets = [0, 0], sizes = [8, 32], strides = [1, 1]} : vector<8x128xbf16> to vector<8x32xbf16>
    %9 = vector.extract_strided_slice %3 {offsets = [0, 0], sizes = [8, 32], strides = [1, 1]} : vector<8x128xbf16> to vector<8x32xbf16>
    %10 = vector.extract_strided_slice %5 {offsets = [0, 0], sizes = [8, 32], strides = [1, 1]} : vector<8x128xbf16> to vector<8x32xbf16>
    %cst = arith.constant dense<0.000000e+00> : vector<8x8xf32>
    %11 = tpu.matmul %8, %9, %cst {dimension_numbers = #tpu.dot_dimension_numbers<[1], [1], [0], [0], [0, 0, 1, 0], [], []>} : vector<8x32xbf16>, vector<8x32xbf16>, vector<8x8xf32> -> vector<8x8xf32>
    %12 = vector.broadcast %7 : vector<1x8xf32> to vector<8x8xf32>
    %13 = arith.addf %11, %12 : vector<8x8xf32>
    %cst_11 = arith.constant dense<0xFF800000> : vector<8xf32>
    %14 = vector.multi_reduction <maximumf>, %13, %cst_11 [1] : vector<8x8xf32> to vector<8xf32>
    %15 = vector.shape_cast %14 : vector<8xf32> to vector<8x1xf32>
    %16 = vector.broadcast %15 : vector<8x1xf32> to vector<8x8xf32>
    %17 = arith.subf %13, %16 : vector<8x8xf32>
    %18 = math.exp %17 : vector<8x8xf32>
    %cst_12 = arith.constant dense<0.000000e+00> : vector<8xf32>
    %19 = vector.multi_reduction <add>, %18, %cst_12 [1] : vector<8x8xf32> to vector<8xf32>
    %20 = vector.shape_cast %19 : vector<8xf32> to vector<8x1xf32>
    %21 = arith.truncf %18 : vector<8x8xf32> to vector<8x8xbf16>
    %cst_13 = arith.constant dense<0.000000e+00> : vector<8x32xf32>
    %22 = tpu.matmul %21, %10, %cst_13 {dimension_numbers = #tpu.dot_dimension_numbers<[1], [0], [0], [1], [0, 0, 1, 1], [], []>} : vector<8x8xbf16>, vector<8x32xbf16>, vector<8x32xf32> -> vector<8x32xf32>
    %23 = tpu.reciprocal %20 {approx = true} : vector<8x1xf32> -> vector<8x1xf32>
    %24 = vector.broadcast %23 : vector<8x1xf32> to vector<8x32xf32>
    %25 = arith.mulf %22, %24 : vector<8x32xf32>
    %26 = vector.extract_strided_slice %1 {offsets = [0, 32], sizes = [8, 32], strides = [1, 1]} : vector<8x128xbf16> to vector<8x32xbf16>
    %27 = vector.extract_strided_slice %3 {offsets = [0, 32], sizes = [8, 32], strides = [1, 1]} : vector<8x128xbf16> to vector<8x32xbf16>
    %28 = vector.extract_strided_slice %5 {offsets = [0, 32], sizes = [8, 32], strides = [1, 1]} : vector<8x128xbf16> to vector<8x32xbf16>
    %cst_14 = arith.constant dense<0.000000e+00> : vector<8x8xf32>
    %29 = tpu.matmul %26, %27, %cst_14 {dimension_numbers = #tpu.dot_dimension_numbers<[1], [1], [0], [0], [0, 0, 1, 0], [], []>} : vector<8x32xbf16>, vector<8x32xbf16>, vector<8x8xf32> -> vector<8x8xf32>
    %30 = vector.broadcast %7 : vector<1x8xf32> to vector<8x8xf32>
    %31 = arith.addf %29, %30 : vector<8x8xf32>
    %cst_15 = arith.constant dense<0xFF800000> : vector<8xf32>
    %32 = vector.multi_reduction <maximumf>, %31, %cst_15 [1] : vector<8x8xf32> to vector<8xf32>
    %33 = vector.shape_cast %32 : vector<8xf32> to vector<8x1xf32>
    %34 = vector.broadcast %33 : vector<8x1xf32> to vector<8x8xf32>
    %35 = arith.subf %31, %34 : vector<8x8xf32>
    %36 = math.exp %35 : vector<8x8xf32>
    %cst_16 = arith.constant dense<0.000000e+00> : vector<8xf32>
    %37 = vector.multi_reduction <add>, %36, %cst_16 [1] : vector<8x8xf32> to vector<8xf32>
    %38 = vector.shape_cast %37 : vector<8xf32> to vector<8x1xf32>
    %39 = arith.truncf %36 : vector<8x8xf32> to vector<8x8xbf16>
    %cst_17 = arith.constant dense<0.000000e+00> : vector<8x32xf32>
    %40 = tpu.matmul %39, %28, %cst_17 {dimension_numbers = #tpu.dot_dimension_numbers<[1], [0], [0], [1], [0, 0, 1, 1], [], []>} : vector<8x8xbf16>, vector<8x32xbf16>, vector<8x32xf32> -> vector<8x32xf32>
    %41 = tpu.reciprocal %38 {approx = true} : vector<8x1xf32> -> vector<8x1xf32>
    %42 = vector.broadcast %41 : vector<8x1xf32> to vector<8x32xf32>
    %43 = arith.mulf %40, %42 : vector<8x32xf32>
    %44 = vector.extract_strided_slice %1 {offsets = [0, 64], sizes = [8, 32], strides = [1, 1]} : vector<8x128xbf16> to vector<8x32xbf16>
    %45 = vector.extract_strided_slice %3 {offsets = [0, 64], sizes = [8, 32], strides = [1, 1]} : vector<8x128xbf16> to vector<8x32xbf16>
    %46 = vector.extract_strided_slice %5 {offsets = [0, 64], sizes = [8, 32], strides = [1, 1]} : vector<8x128xbf16> to vector<8x32xbf16>
    %cst_18 = arith.constant dense<0.000000e+00> : vector<8x8xf32>
    %47 = tpu.matmul %44, %45, %cst_18 {dimension_numbers = #tpu.dot_dimension_numbers<[1], [1], [0], [0], [0, 0, 1, 0], [], []>} : vector<8x32xbf16>, vector<8x32xbf16>, vector<8x8xf32> -> vector<8x8xf32>
    %48 = vector.broadcast %7 : vector<1x8xf32> to vector<8x8xf32>
    %49 = arith.addf %47, %48 : vector<8x8xf32>
    %cst_19 = arith.constant dense<0xFF800000> : vector<8xf32>
    %50 = vector.multi_reduction <maximumf>, %49, %cst_19 [1] : vector<8x8xf32> to vector<8xf32>
    %51 = vector.shape_cast %50 : vector<8xf32> to vector<8x1xf32>
    %52 = vector.broadcast %51 : vector<8x1xf32> to vector<8x8xf32>
    %53 = arith.subf %49, %52 : vector<8x8xf32>
    %54 = math.exp %53 : vector<8x8xf32>
    %cst_20 = arith.constant dense<0.000000e+00> : vector<8xf32>
    %55 = vector.multi_reduction <add>, %54, %cst_20 [1] : vector<8x8xf32> to vector<8xf32>
    %56 = vector.shape_cast %55 : vector<8xf32> to vector<8x1xf32>
    %57 = arith.truncf %54 : vector<8x8xf32> to vector<8x8xbf16>
    %cst_21 = arith.constant dense<0.000000e+00> : vector<8x32xf32>
    %58 = tpu.matmul %57, %46, %cst_21 {dimension_numbers = #tpu.dot_dimension_numbers<[1], [0], [0], [1], [0, 0, 1, 1], [], []>} : vector<8x8xbf16>, vector<8x32xbf16>, vector<8x32xf32> -> vector<8x32xf32>
    %59 = tpu.reciprocal %56 {approx = true} : vector<8x1xf32> -> vector<8x1xf32>
    %60 = vector.broadcast %59 : vector<8x1xf32> to vector<8x32xf32>
    %61 = arith.mulf %58, %60 : vector<8x32xf32>
    %62 = vector.extract_strided_slice %1 {offsets = [0, 96], sizes = [8, 32], strides = [1, 1]} : vector<8x128xbf16> to vector<8x32xbf16>
    %63 = vector.extract_strided_slice %3 {offsets = [0, 96], sizes = [8, 32], strides = [1, 1]} : vector<8x128xbf16> to vector<8x32xbf16>
    %64 = vector.extract_strided_slice %5 {offsets = [0, 96], sizes = [8, 32], strides = [1, 1]} : vector<8x128xbf16> to vector<8x32xbf16>
    %cst_22 = arith.constant dense<0.000000e+00> : vector<8x8xf32>
    %65 = tpu.matmul %62, %63, %cst_22 {dimension_numbers = #tpu.dot_dimension_numbers<[1], [1], [0], [0], [0, 0, 1, 0], [], []>} : vector<8x32xbf16>, vector<8x32xbf16>, vector<8x8xf32> -> vector<8x8xf32>
    %66 = vector.broadcast %7 : vector<1x8xf32> to vector<8x8xf32>
    %67 = arith.addf %65, %66 : vector<8x8xf32>
    %cst_23 = arith.constant dense<0xFF800000> : vector<8xf32>
    %68 = vector.multi_reduction <maximumf>, %67, %cst_23 [1] : vector<8x8xf32> to vector<8xf32>
    %69 = vector.shape_cast %68 : vector<8xf32> to vector<8x1xf32>
    %70 = vector.broadcast %69 : vector<8x1xf32> to vector<8x8xf32>
    %71 = arith.subf %67, %70 : vector<8x8xf32>
    %72 = math.exp %71 : vector<8x8xf32>
    %cst_24 = arith.constant dense<0.000000e+00> : vector<8xf32>
    %73 = vector.multi_reduction <add>, %72, %cst_24 [1] : vector<8x8xf32> to vector<8xf32>
    %74 = vector.shape_cast %73 : vector<8xf32> to vector<8x1xf32>
    %75 = arith.truncf %72 : vector<8x8xf32> to vector<8x8xbf16>
    %cst_25 = arith.constant dense<0.000000e+00> : vector<8x32xf32>
    %76 = tpu.matmul %75, %64, %cst_25 {dimension_numbers = #tpu.dot_dimension_numbers<[1], [0], [0], [1], [0, 0, 1, 1], [], []>} : vector<8x8xbf16>, vector<8x32xbf16>, vector<8x32xf32> -> vector<8x32xf32>
    %77 = tpu.reciprocal %74 {approx = true} : vector<8x1xf32> -> vector<8x1xf32>
    %78 = vector.broadcast %77 : vector<8x1xf32> to vector<8x32xf32>
    %79 = arith.mulf %76, %78 : vector<8x32xf32>
    %80 = tpu.concatenate %25, %43, %61, %79 in 1 : vector<8x32xf32>, vector<8x32xf32>, vector<8x32xf32>, vector<8x32xf32> -> vector<8x128xf32>
    %81 = arith.truncf %80 : vector<8x128xf32> to vector<8x128xbf16>
    %c0_26 = arith.constant 0 : index
    %c0_27 = arith.constant 0 : index
    %c0_28 = arith.constant 0 : index
    %82 = vector.load %arg6[%c0_26, %c0_27, %c0_28] : memref<1x8x128xbf16, #tpu.memory_space<vmem>>, vector<1x8x128xbf16>
    %83 = vector.shape_cast %82 : vector<1x8x128xbf16> to vector<8x128xbf16>
    %84 = vector.shape_cast %81 : vector<8x128xbf16> to vector<1x8x128xbf16>
    tpu.vector_store %arg6[%c0_26, %c0_27, %c0_28], %84 {strides = array<i32>} : memref<1x8x128xbf16, #tpu.memory_space<vmem>>, vector<1x8x128xbf16>,
    return
  }
  func.func @transform_0(%arg0: i32, %arg1: i32) -> (i32, i32, i32) {
    %c0_i32 = arith.constant 0 : i32
    %c0_i32_0 = arith.constant 0 : i32
    return %arg0, %c0_i32, %arg1 : i32, i32, i32
  }
  func.func @transform_1(%arg0: i32, %arg1: i32) -> (i32, i32, i32) {
    %c1_i32 = arith.constant 1 : i32
    %0 = arith.addi %c1_i32, %arg1 : i32
    %c0_i32 = arith.constant 0 : i32
    %c0_i32_0 = arith.constant 0 : i32
    return %arg0, %c0_i32, %0 : i32, i32, i32
  }
  func.func @transform_2(%arg0: i32, %arg1: i32) -> (i32, i32, i32) {
    %c2_i32 = arith.constant 2 : i32
    %0 = arith.addi %c2_i32, %arg1 : i32
    %c0_i32 = arith.constant 0 : i32
    %c0_i32_0 = arith.constant 0 : i32
    return %arg0, %c0_i32, %0 : i32, i32, i32
  }
  func.func @transform_3(%arg0: i32, %arg1: i32) -> (i32, i32, i32) {
    %c0_i32 = arith.constant 0 : i32
    %c0_i32_0 = arith.constant 0 : i32
    %c0_i32_1 = arith.constant 0 : i32
    return %arg0, %c0_i32, %c0_i32_0 : i32, i32, i32
  }
  func.func @transform_4(%arg0: i32, %arg1: i32) -> (i32, i32, i32) {
    %c0_i32 = arith.constant 0 : i32
    %c0_i32_0 = arith.constant 0 : i32
    return %arg0, %c0_i32, %arg1 : i32, i32, i32
  }
}

module attributes {stable_mosaic.version = 11 : i64} {
  func.func @_fused_linear_resident_kernel(%arg0: i32, %arg1: memref<16x128xbf16, #tpu.memory_space<vmem>>, %arg2: memref<128x128xbf16, #tpu.memory_space<vmem>>, %arg3: memref<1x128xf32, #tpu.memory_space<vmem>>, %arg4: memref<16x128xbf16, #tpu.memory_space<vmem>>, %arg5: memref<1x128xf32, #tpu.memory_space<vmem>>, %arg6: memref<1x128xf32, #tpu.memory_space<vmem>>, %arg7: memref<16x128xbf16, #tpu.memory_space<vmem>>) attributes {dimension_semantics = [#tpu.dimension_semantics<parallel>], iteration_bounds = array<i64: 1>, scalar_prefetch = 0 : i64, scratch_operands = 0 : i64, tpu.core_type = #tpu.core_type<tc>, window_params = [{transform_indices = @transform_0, window_bounds = array<i64: 16, 128>}, {pipeline_mode = #tpu.pipeline_mode<synchronous>, transform_indices = @transform_1, window_bounds = array<i64: 128, 128>}, {pipeline_mode = #tpu.pipeline_mode<synchronous>, transform_indices = @transform_2, window_bounds = array<i64: 1, 128>}, {transform_indices = @transform_3, window_bounds = array<i64: 16, 128>}, {pipeline_mode = #tpu.pipeline_mode<synchronous>, transform_indices = @transform_4, window_bounds = array<i64: 1, 128>}, {pipeline_mode = #tpu.pipeline_mode<synchronous>, transform_indices = @transform_5, window_bounds = array<i64: 1, 128>}, {transform_indices = @transform_6, window_bounds = array<i64: 16, 128>}]} {
    %c0 = arith.constant 0 : index
    %c0_0 = arith.constant 0 : index
    %0 = vector.load %arg1[%c0, %c0_0] : memref<16x128xbf16, #tpu.memory_space<vmem>>, vector<16x128xbf16>
    %c0_1 = arith.constant 0 : index
    %c0_2 = arith.constant 0 : index
    %1 = vector.load %arg2[%c0_1, %c0_2] : memref<128x128xbf16, #tpu.memory_space<vmem>>, vector<128x128xbf16>
    %cst = arith.constant dense<0.000000e+00> : vector<16x128xf32>
    %2 = tpu.matmul %0, %1, %cst {dimension_numbers = #tpu.dot_dimension_numbers<[1], [0], [0], [1], [0, 0, 1, 1], [], []>} : vector<16x128xbf16>, vector<128x128xbf16>, vector<16x128xf32> -> vector<16x128xf32>
    %c0_3 = arith.constant 0 : index
    %c0_4 = arith.constant 0 : index
    %3 = vector.load %arg3[%c0_3, %c0_4] : memref<1x128xf32, #tpu.memory_space<vmem>>, vector<1x128xf32>
    %4 = vector.broadcast %3 : vector<1x128xf32> to vector<16x128xf32>
    %5 = arith.addf %2, %4 : vector<16x128xf32>
    %c0_5 = arith.constant 0 : index
    %c0_6 = arith.constant 0 : index
    %6 = vector.load %arg4[%c0_5, %c0_6] : memref<16x128xbf16, #tpu.memory_space<vmem>>, vector<16x128xbf16>
    %7 = arith.extf %6 : vector<16x128xbf16> to vector<16x128xf32>
    %8 = arith.addf %5, %7 : vector<16x128xf32>
    %cst_7 = arith.constant dense<0.000000e+00> : vector<16xf32>
    %9 = vector.multi_reduction <add>, %8, %cst_7 [1] : vector<16x128xf32> to vector<16xf32>
    %10 = vector.shape_cast %9 : vector<16xf32> to vector<16x1xf32>
    %cst_8 = arith.constant 1.280000e+02 : f32
    %11 = vector.broadcast %cst_8 : f32 to vector<16x1xf32>
    %12 = arith.divf %10, %11 : vector<16x1xf32>
    %13 = vector.broadcast %12 : vector<16x1xf32> to vector<16x128xf32>
    %14 = arith.subf %8, %13 : vector<16x128xf32>
    %15 = arith.mulf %14, %14 : vector<16x128xf32>
    %cst_9 = arith.constant dense<0.000000e+00> : vector<16xf32>
    %16 = vector.multi_reduction <add>, %15, %cst_9 [1] : vector<16x128xf32> to vector<16xf32>
    %17 = vector.shape_cast %16 : vector<16xf32> to vector<16x1xf32>
    %cst_10 = arith.constant 1.280000e+02 : f32
    %18 = vector.broadcast %cst_10 : f32 to vector<16x1xf32>
    %19 = arith.divf %17, %18 : vector<16x1xf32>
    %20 = vector.broadcast %12 : vector<16x1xf32> to vector<16x128xf32>
    %21 = arith.subf %8, %20 : vector<16x128xf32>
    %cst_11 = arith.constant 9.99999996E-13 : f32
    %22 = vector.broadcast %cst_11 : f32 to vector<16x1xf32>
    %23 = arith.addf %19, %22 : vector<16x1xf32>
    %24 = math.rsqrt %23 : vector<16x1xf32>
    %25 = vector.broadcast %24 : vector<16x1xf32> to vector<16x128xf32>
    %26 = arith.mulf %21, %25 : vector<16x128xf32>
    %c0_12 = arith.constant 0 : index
    %c0_13 = arith.constant 0 : index
    %27 = vector.load %arg5[%c0_12, %c0_13] : memref<1x128xf32, #tpu.memory_space<vmem>>, vector<1x128xf32>
    %28 = vector.broadcast %27 : vector<1x128xf32> to vector<16x128xf32>
    %29 = arith.mulf %26, %28 : vector<16x128xf32>
    %c0_14 = arith.constant 0 : index
    %c0_15 = arith.constant 0 : index
    %30 = vector.load %arg6[%c0_14, %c0_15] : memref<1x128xf32, #tpu.memory_space<vmem>>, vector<1x128xf32>
    %31 = vector.broadcast %30 : vector<1x128xf32> to vector<16x128xf32>
    %32 = arith.addf %29, %31 : vector<16x128xf32>
    %33 = arith.truncf %32 : vector<16x128xf32> to vector<16x128xbf16>
    %c0_16 = arith.constant 0 : index
    %c0_17 = arith.constant 0 : index
    %34 = vector.load %arg7[%c0_16, %c0_17] : memref<16x128xbf16, #tpu.memory_space<vmem>>, vector<16x128xbf16>
    tpu.vector_store %arg7[%c0_16, %c0_17], %33 {strides = array<i32>} : memref<16x128xbf16, #tpu.memory_space<vmem>>, vector<16x128xbf16>,
    return
  }
  func.func @transform_0(%arg0: i32) -> (i32, i32) {
    %c0_i32 = arith.constant 0 : i32
    %c0_i32_0 = arith.constant 0 : i32
    return %arg0, %c0_i32 : i32, i32
  }
  func.func @transform_1(%arg0: i32) -> (i32, i32) {
    %c0_i32 = arith.constant 0 : i32
    %c0_i32_0 = arith.constant 0 : i32
    %c0_i32_1 = arith.constant 0 : i32
    return %c0_i32, %c0_i32_0 : i32, i32
  }
  func.func @transform_2(%arg0: i32) -> (i32, i32) {
    %c0_i32 = arith.constant 0 : i32
    %c0_i32_0 = arith.constant 0 : i32
    %c0_i32_1 = arith.constant 0 : i32
    return %c0_i32, %c0_i32_0 : i32, i32
  }
  func.func @transform_3(%arg0: i32) -> (i32, i32) {
    %c0_i32 = arith.constant 0 : i32
    %c0_i32_0 = arith.constant 0 : i32
    return %arg0, %c0_i32 : i32, i32
  }
  func.func @transform_4(%arg0: i32) -> (i32, i32) {
    %c0_i32 = arith.constant 0 : i32
    %c0_i32_0 = arith.constant 0 : i32
    %c0_i32_1 = arith.constant 0 : i32
    return %c0_i32, %c0_i32_0 : i32, i32
  }
  func.func @transform_5(%arg0: i32) -> (i32, i32) {
    %c0_i32 = arith.constant 0 : i32
    %c0_i32_0 = arith.constant 0 : i32
    %c0_i32_1 = arith.constant 0 : i32
    return %c0_i32, %c0_i32_0 : i32, i32
  }
  func.func @transform_6(%arg0: i32) -> (i32, i32) {
    %c0_i32 = arith.constant 0 : i32
    %c0_i32_0 = arith.constant 0 : i32
    return %arg0, %c0_i32 : i32, i32
  }
}

module attributes {stable_mosaic.version = 11 : i64} {
  func.func @_fused_linear_resident_kernel(%arg0: i32, %arg1: memref<16x256xbf16, #tpu.memory_space<vmem>>, %arg2: memref<256x128xbf16, #tpu.memory_space<vmem>>, %arg3: memref<1x128xf32, #tpu.memory_space<vmem>>, %arg4: memref<16x128xbf16, #tpu.memory_space<vmem>>, %arg5: memref<1x128xf32, #tpu.memory_space<vmem>>, %arg6: memref<1x128xf32, #tpu.memory_space<vmem>>, %arg7: memref<16x128xbf16, #tpu.memory_space<vmem>>) attributes {dimension_semantics = [#tpu.dimension_semantics<parallel>], iteration_bounds = array<i64: 1>, scalar_prefetch = 0 : i64, scratch_operands = 0 : i64, tpu.core_type = #tpu.core_type<tc>, window_params = [{transform_indices = @transform_0, window_bounds = array<i64: 16, 256>}, {pipeline_mode = #tpu.pipeline_mode<synchronous>, transform_indices = @transform_1, window_bounds = array<i64: 256, 128>}, {pipeline_mode = #tpu.pipeline_mode<synchronous>, transform_indices = @transform_2, window_bounds = array<i64: 1, 128>}, {transform_indices = @transform_3, window_bounds = array<i64: 16, 128>}, {pipeline_mode = #tpu.pipeline_mode<synchronous>, transform_indices = @transform_4, window_bounds = array<i64: 1, 128>}, {pipeline_mode = #tpu.pipeline_mode<synchronous>, transform_indices = @transform_5, window_bounds = array<i64: 1, 128>}, {transform_indices = @transform_6, window_bounds = array<i64: 16, 128>}]} {
    %c0 = arith.constant 0 : index
    %c0_0 = arith.constant 0 : index
    %0 = vector.load %arg1[%c0, %c0_0] : memref<16x256xbf16, #tpu.memory_space<vmem>>, vector<16x256xbf16>
    %c0_1 = arith.constant 0 : index
    %c0_2 = arith.constant 0 : index
    %1 = vector.load %arg2[%c0_1, %c0_2] : memref<256x128xbf16, #tpu.memory_space<vmem>>, vector<256x128xbf16>
    %cst = arith.constant dense<0.000000e+00> : vector<16x128xf32>
    %2 = tpu.matmul %0, %1, %cst {dimension_numbers = #tpu.dot_dimension_numbers<[1], [0], [0], [1], [0, 0, 1, 1], [], []>} : vector<16x256xbf16>, vector<256x128xbf16>, vector<16x128xf32> -> vector<16x128xf32>
    %c0_3 = arith.constant 0 : index
    %c0_4 = arith.constant 0 : index
    %3 = vector.load %arg3[%c0_3, %c0_4] : memref<1x128xf32, #tpu.memory_space<vmem>>, vector<1x128xf32>
    %4 = vector.broadcast %3 : vector<1x128xf32> to vector<16x128xf32>
    %5 = arith.addf %2, %4 : vector<16x128xf32>
    %c0_5 = arith.constant 0 : index
    %c0_6 = arith.constant 0 : index
    %6 = vector.load %arg4[%c0_5, %c0_6] : memref<16x128xbf16, #tpu.memory_space<vmem>>, vector<16x128xbf16>
    %7 = arith.extf %6 : vector<16x128xbf16> to vector<16x128xf32>
    %8 = arith.addf %5, %7 : vector<16x128xf32>
    %cst_7 = arith.constant dense<0.000000e+00> : vector<16xf32>
    %9 = vector.multi_reduction <add>, %8, %cst_7 [1] : vector<16x128xf32> to vector<16xf32>
    %10 = vector.shape_cast %9 : vector<16xf32> to vector<16x1xf32>
    %cst_8 = arith.constant 1.280000e+02 : f32
    %11 = vector.broadcast %cst_8 : f32 to vector<16x1xf32>
    %12 = arith.divf %10, %11 : vector<16x1xf32>
    %13 = vector.broadcast %12 : vector<16x1xf32> to vector<16x128xf32>
    %14 = arith.subf %8, %13 : vector<16x128xf32>
    %15 = arith.mulf %14, %14 : vector<16x128xf32>
    %cst_9 = arith.constant dense<0.000000e+00> : vector<16xf32>
    %16 = vector.multi_reduction <add>, %15, %cst_9 [1] : vector<16x128xf32> to vector<16xf32>
    %17 = vector.shape_cast %16 : vector<16xf32> to vector<16x1xf32>
    %cst_10 = arith.constant 1.280000e+02 : f32
    %18 = vector.broadcast %cst_10 : f32 to vector<16x1xf32>
    %19 = arith.divf %17, %18 : vector<16x1xf32>
    %20 = vector.broadcast %12 : vector<16x1xf32> to vector<16x128xf32>
    %21 = arith.subf %8, %20 : vector<16x128xf32>
    %cst_11 = arith.constant 9.99999996E-13 : f32
    %22 = vector.broadcast %cst_11 : f32 to vector<16x1xf32>
    %23 = arith.addf %19, %22 : vector<16x1xf32>
    %24 = math.rsqrt %23 : vector<16x1xf32>
    %25 = vector.broadcast %24 : vector<16x1xf32> to vector<16x128xf32>
    %26 = arith.mulf %21, %25 : vector<16x128xf32>
    %c0_12 = arith.constant 0 : index
    %c0_13 = arith.constant 0 : index
    %27 = vector.load %arg5[%c0_12, %c0_13] : memref<1x128xf32, #tpu.memory_space<vmem>>, vector<1x128xf32>
    %28 = vector.broadcast %27 : vector<1x128xf32> to vector<16x128xf32>
    %29 = arith.mulf %26, %28 : vector<16x128xf32>
    %c0_14 = arith.constant 0 : index
    %c0_15 = arith.constant 0 : index
    %30 = vector.load %arg6[%c0_14, %c0_15] : memref<1x128xf32, #tpu.memory_space<vmem>>, vector<1x128xf32>
    %31 = vector.broadcast %30 : vector<1x128xf32> to vector<16x128xf32>
    %32 = arith.addf %29, %31 : vector<16x128xf32>
    %33 = arith.truncf %32 : vector<16x128xf32> to vector<16x128xbf16>
    %c0_16 = arith.constant 0 : index
    %c0_17 = arith.constant 0 : index
    %34 = vector.load %arg7[%c0_16, %c0_17] : memref<16x128xbf16, #tpu.memory_space<vmem>>, vector<16x128xbf16>
    tpu.vector_store %arg7[%c0_16, %c0_17], %33 {strides = array<i32>} : memref<16x128xbf16, #tpu.memory_space<vmem>>, vector<16x128xbf16>,
    return
  }
  func.func @transform_0(%arg0: i32) -> (i32, i32) {
    %c0_i32 = arith.constant 0 : i32
    %c0_i32_0 = arith.constant 0 : i32
    return %arg0, %c0_i32 : i32, i32
  }
  func.func @transform_1(%arg0: i32) -> (i32, i32) {
    %c0_i32 = arith.constant 0 : i32
    %c0_i32_0 = arith.constant 0 : i32
    %c0_i32_1 = arith.constant 0 : i32
    return %c0_i32, %c0_i32_0 : i32, i32
  }
  func.func @transform_2(%arg0: i32) -> (i32, i32) {
    %c0_i32 = arith.constant 0 : i32
    %c0_i32_0 = arith.constant 0 : i32
    %c0_i32_1 = arith.constant 0 : i32
    return %c0_i32, %c0_i32_0 : i32, i32
  }
  func.func @transform_3(%arg0: i32) -> (i32, i32) {
    %c0_i32 = arith.constant 0 : i32
    %c0_i32_0 = arith.constant 0 : i32
    return %arg0, %c0_i32 : i32, i32
  }
  func.func @transform_4(%arg0: i32) -> (i32, i32) {
    %c0_i32 = arith.constant 0 : i32
    %c0_i32_0 = arith.constant 0 : i32
    %c0_i32_1 = arith.constant 0 : i32
    return %c0_i32, %c0_i32_0 : i32, i32
  }
  func.func @transform_5(%arg0: i32) -> (i32, i32) {
    %c0_i32 = arith.constant 0 : i32
    %c0_i32_0 = arith.constant 0 : i32
    %c0_i32_1 = arith.constant 0 : i32
    return %c0_i32, %c0_i32_0 : i32, i32
  }
  func.func @transform_6(%arg0: i32) -> (i32, i32) {
    %c0_i32 = arith.constant 0 : i32
    %c0_i32_0 = arith.constant 0 : i32
    return %arg0, %c0_i32 : i32, i32
  }
}

module attributes {stable_mosaic.version = 11 : i64} {
  func.func @_fused_linear_resident_kernel(%arg0: i32, %arg1: memref<2x128xbf16, #tpu.memory_space<vmem>>, %arg2: memref<128x128xbf16, #tpu.memory_space<vmem>>, %arg3: memref<1x128xf32, #tpu.memory_space<vmem>>, %arg4: memref<2x128xf32, #tpu.memory_space<vmem>>) attributes {dimension_semantics = [#tpu.dimension_semantics<parallel>], iteration_bounds = array<i64: 1>, scalar_prefetch = 0 : i64, scratch_operands = 0 : i64, tpu.core_type = #tpu.core_type<tc>, window_params = [{transform_indices = @transform_0, window_bounds = array<i64: 2, 128>}, {pipeline_mode = #tpu.pipeline_mode<synchronous>, transform_indices = @transform_1, window_bounds = array<i64: 128, 128>}, {pipeline_mode = #tpu.pipeline_mode<synchronous>, transform_indices = @transform_2, window_bounds = array<i64: 1, 128>}, {transform_indices = @transform_3, window_bounds = array<i64: 2, 128>}]} {
    %c0 = arith.constant 0 : index
    %c0_0 = arith.constant 0 : index
    %0 = vector.load %arg1[%c0, %c0_0] : memref<2x128xbf16, #tpu.memory_space<vmem>>, vector<2x128xbf16>
    %c0_1 = arith.constant 0 : index
    %c0_2 = arith.constant 0 : index
    %1 = vector.load %arg2[%c0_1, %c0_2] : memref<128x128xbf16, #tpu.memory_space<vmem>>, vector<128x128xbf16>
    %cst = arith.constant dense<0.000000e+00> : vector<2x128xf32>
    %2 = tpu.matmul %0, %1, %cst {dimension_numbers = #tpu.dot_dimension_numbers<[1], [0], [0], [1], [0, 0, 1, 1], [], []>} : vector<2x128xbf16>, vector<128x128xbf16>, vector<2x128xf32> -> vector<2x128xf32>
    %c0_3 = arith.constant 0 : index
    %c0_4 = arith.constant 0 : index
    %3 = vector.load %arg3[%c0_3, %c0_4] : memref<1x128xf32, #tpu.memory_space<vmem>>, vector<1x128xf32>
    %4 = vector.broadcast %3 : vector<1x128xf32> to vector<2x128xf32>
    %5 = arith.addf %2, %4 : vector<2x128xf32>
    %6 = math.tanh %5 : vector<2x128xf32>
    %c0_5 = arith.constant 0 : index
    %c0_6 = arith.constant 0 : index
    %7 = vector.load %arg4[%c0_5, %c0_6] : memref<2x128xf32, #tpu.memory_space<vmem>>, vector<2x128xf32>
    tpu.vector_store %arg4[%c0_5, %c0_6], %6 {strides = array<i32>} : memref<2x128xf32, #tpu.memory_space<vmem>>, vector<2x128xf32>,
    return
  }
  func.func @transform_0(%arg0: i32) -> (i32, i32) {
    %c0_i32 = arith.constant 0 : i32
    %c0_i32_0 = arith.constant 0 : i32
    return %arg0, %c0_i32 : i32, i32
  }
  func.func @transform_1(%arg0: i32) -> (i32, i32) {
    %c0_i32 = arith.constant 0 : i32
    %c0_i32_0 = arith.constant 0 : i32
    %c0_i32_1 = arith.constant 0 : i32
    return %c0_i32, %c0_i32_0 : i32, i32
  }
  func.func @transform_2(%arg0: i32) -> (i32, i32) {
    %c0_i32 = arith.constant 0 : i32
    %c0_i32_0 = arith.constant 0 : i32
    %c0_i32_1 = arith.constant 0 : i32
    return %c0_i32, %c0_i32_0 : i32, i32
  }
  func.func @transform_3(%arg0: i32) -> (i32, i32) {
    %c0_i32 = arith.constant 0 : i32
    %c0_i32_0 = arith.constant 0 : i32
    return %arg0, %c0_i32 : i32, i32
  }
}

module attributes {stable_mosaic.version = 11 : i64} {
  func.func @_fused_linear_resident_kernel(%arg0: i32, %arg1: memref<16x128xbf16, #tpu.memory_space<vmem>>, %arg2: memref<128x256xbf16, #tpu.memory_space<vmem>>, %arg3: memref<1x256xf32, #tpu.memory_space<vmem>>, %arg4: memref<16x256xbf16, #tpu.memory_space<vmem>>) attributes {dimension_semantics = [#tpu.dimension_semantics<parallel>], iteration_bounds = array<i64: 1>, scalar_prefetch = 0 : i64, scratch_operands = 0 : i64, tpu.core_type = #tpu.core_type<tc>, window_params = [{transform_indices = @transform_0, window_bounds = array<i64: 16, 128>}, {pipeline_mode = #tpu.pipeline_mode<synchronous>, transform_indices = @transform_1, window_bounds = array<i64: 128, 256>}, {pipeline_mode = #tpu.pipeline_mode<synchronous>, transform_indices = @transform_2, window_bounds = array<i64: 1, 256>}, {transform_indices = @transform_3, window_bounds = array<i64: 16, 256>}]} {
    %c0 = arith.constant 0 : index
    %c0_0 = arith.constant 0 : index
    %0 = vector.load %arg1[%c0, %c0_0] : memref<16x128xbf16, #tpu.memory_space<vmem>>, vector<16x128xbf16>
    %c0_1 = arith.constant 0 : index
    %c0_2 = arith.constant 0 : index
    %1 = vector.load %arg2[%c0_1, %c0_2] : memref<128x256xbf16, #tpu.memory_space<vmem>>, vector<128x256xbf16>
    %cst = arith.constant dense<0.000000e+00> : vector<16x256xf32>
    %2 = tpu.matmul %0, %1, %cst {dimension_numbers = #tpu.dot_dimension_numbers<[1], [0], [0], [1], [0, 0, 1, 1], [], []>} : vector<16x128xbf16>, vector<128x256xbf16>, vector<16x256xf32> -> vector<16x256xf32>
    %c0_3 = arith.constant 0 : index
    %c0_4 = arith.constant 0 : index
    %3 = vector.load %arg3[%c0_3, %c0_4] : memref<1x256xf32, #tpu.memory_space<vmem>>, vector<1x256xf32>
    %4 = vector.broadcast %3 : vector<1x256xf32> to vector<16x256xf32>
    %5 = arith.addf %2, %4 : vector<16x256xf32>
    %6 = arith.mulf %5, %5 : vector<16x256xf32>
    %7 = arith.mulf %5, %6 : vector<16x256xf32>
    %cst_5 = arith.constant 4.471500e-02 : f32
    %8 = vector.broadcast %cst_5 : f32 to vector<16x256xf32>
    %9 = arith.mulf %8, %7 : vector<16x256xf32>
    %10 = arith.addf %5, %9 : vector<16x256xf32>
    %cst_6 = arith.constant 0.797884583 : f32
    %11 = vector.broadcast %cst_6 : f32 to vector<16x256xf32>
    %12 = arith.mulf %11, %10 : vector<16x256xf32>
    %13 = math.tanh %12 : vector<16x256xf32>
    %cst_7 = arith.constant 1.000000e+00 : f32
    %14 = vector.broadcast %cst_7 : f32 to vector<16x256xf32>
    %15 = arith.addf %14, %13 : vector<16x256xf32>
    %cst_8 = arith.constant 5.000000e-01 : f32
    %16 = vector.broadcast %cst_8 : f32 to vector<16x256xf32>
    %17 = arith.mulf %16, %15 : vector<16x256xf32>
    %18 = arith.mulf %5, %17 : vector<16x256xf32>
    %19 = arith.truncf %18 : vector<16x256xf32> to vector<16x256xbf16>
    %c0_9 = arith.constant 0 : index
    %c0_10 = arith.constant 0 : index
    %20 = vector.load %arg4[%c0_9, %c0_10] : memref<16x256xbf16, #tpu.memory_space<vmem>>, vector<16x256xbf16>
    tpu.vector_store %arg4[%c0_9, %c0_10], %19 {strides = array<i32>} : memref<16x256xbf16, #tpu.memory_space<vmem>>, vector<16x256xbf16>,
    return
  }
  func.func @transform_0(%arg0: i32) -> (i32, i32) {
    %c0_i32 = arith.constant 0 : i32
    %c0_i32_0 = arith.constant 0 : i32
    return %arg0, %c0_i32 : i32, i32
  }
  func.func @transform_1(%arg0: i32) -> (i32, i32) {
    %c0_i32 = arith.constant 0 : i32
    %c0_i32_0 = arith.constant 0 : i32
    %c0_i32_1 = arith.constant 0 : i32
    return %c0_i32, %c0_i32_0 : i32, i32
  }
  func.func @transform_2(%arg0: i32) -> (i32, i32) {
    %c0_i32 = arith.constant 0 : i32
    %c0_i32_0 = arith.constant 0 : i32
    %c0_i32_1 = arith.constant 0 : i32
    return %c0_i32, %c0_i32_0 : i32, i32
  }
  func.func @transform_3(%arg0: i32) -> (i32, i32) {
    %c0_i32 = arith.constant 0 : i32
    %c0_i32_0 = arith.constant 0 : i32
    return %arg0, %c0_i32 : i32, i32
  }
}

</mosaic_0001>

<llo_original>
// kernel: _lambda_.12
$region0: #{_lambda_.12}
  #allocation0 [shape = 'u32[]', space=smem, size = 0x4, offset = 0x4, fixed_abs, tag = 'smem constant byte address 0x4 - core index']
  #allocation1 [shape = 'u32[144,128]{1,0:T(1,128)}', space=vmem, size = 0x12000, scoped, tag = 'internal scratch']
  %s0 = inlined_call_operand.vmem [shape: f32[16,128], index: 0, kind: input, shape index: {}]
  %s1 = inlined_call_operand.vmem [shape: f32[1,128], index: 1, kind: input, shape index: {}]
  %s2 = inlined_call_operand.vmem [shape: f32[1,128], index: 2, kind: input, shape index: {}]
  %s3 = inlined_call_operand.vmem [shape: bf16[16,128], index: 3, kind: output, shape index: {}]
  %s4 = sld [smem:[#allocation0]]
  $region22: #{_lambda_.12} parent=0
    _
  %s6 = ssub.s32 1, %s4
  %s7 = scalar_select 0, %s6, %s4
  // Predicated region
  $region2: #{_lambda_.12} parent=0 // pred_check
    _
  $region3: #{_lambda_.12} parent=0 // pred_check_branch
    %9 = sbr.rel (0) target = $region5
  $region4: #{_lambda_.12} parent=0 // pred_region
    _
  $region5: #{_lambda_.12} parent=0 // pred_fallthru
    _
  // Predicated region
  $region6: #{_lambda_.12} parent=0 // pred_check
    _
  $region7: #{_lambda_.12} parent=0 // pred_check_branch
    %11 = sbr.rel (0) target = $region9
  $region8: #{_lambda_.12} parent=0 // pred_region
    _
  $region9: #{_lambda_.12} parent=0 // pred_fallthru
    _
  // Predicated region
  $region10: #{_lambda_.12} parent=0 // pred_check
    _
  $region11: #{_lambda_.12} parent=0 // pred_check_branch
    %13 = sbr.rel (0) target = $region13
  $region12: #{_lambda_.12} parent=0 // pred_region
    _
  $region13: #{_lambda_.12} parent=0 // pred_fallthru
    _
  %v14 = vld [vmem:[%s0] sm:$0xff]
  %v15 = vld [vmem:[%s0 + $0x8] sm:$0xff]
  %16 = vadd.xlane.f32.xlu0 %v14
  %v17 = vpop.xlane.xlu0 %16
  %18 = vadd.xlane.f32.xlu0 %v15
  %v19 = vpop.xlane.xlu0 %18
  %v20 = vrcp.pop 128.0
  %v21 = vmul.f32 %v17, %v20
  %v22 = vmul.f32 %v19, %v20
  %v23 = vsub.f32 %v14, %v21
  %v24 = vsub.f32 %v15, %v22
  %v25 = vmul.f32 %v23, %v23
  %v26 = vmul.f32 %v24, %v24
  %27 = vadd.xlane.f32.xlu0 %v25
  %v28 = vpop.xlane.xlu0 %27
  %29 = vadd.xlane.f32.xlu0 %v26
  %v30 = vpop.xlane.xlu0 %29
  %v31 = vmul.f32 %v28, %v20
  %v32 = vmul.f32 %v30, %v20
  %v33 = vadd.f32 %v31, 1e-12
  %v34 = vadd.f32 %v32, 1e-12
  %v35 = vrsqrt.pop %v33
  %v36 = vrsqrt.pop %v34
  %v37 = vmul.f32 %v23, %v35
  %v38 = vmul.f32 %v24, %v36
  %v39 = vld [vmem:[%s1] sm:$0x1]
  %v41 = vlaneseq
  %v42 = vshrl.u32 %v41, 7
  %v43 = vsub.s32 0, %v42
  %v44 = vrot.slane %v39, %v43
  %v46 = vmul.f32 %v37, %v44
  %v47 = vmul.f32 %v38, %v44
  %v48 = vld [vmem:[%s2] sm:$0x1]
  %v50 = vlaneseq
  %v51 = vshrl.u32 %v50, 7
  %v52 = vsub.s32 0, %v51
  %v53 = vrot.slane %v48, %v52
  %v55 = vadd.f32 %v46, %v53
  %v56 = vadd.f32 %v47, %v53
  %v57 = vpack.c.bf16 %v56, %v55
  %v59 = vunpack.c.l.b16 %v57
  %v60 = vunpack.c.h.b16 %v57
  %v61 = vpack.c.b16 %v59, %v59
  %v62 = vpack.c.b16 %v60, %v60
  %65 = vst [vmem:[%s3] sm:$0xf] %v61
  %66 = vst [vmem:[%s3 + $0x4] sm:$0xf] %v62
  // Predicated region
  $region14: #{_lambda_.12} parent=0 // pred_check
    _
  $region15: #{_lambda_.12} parent=0 // pred_check_branch
    %68 = sbr.rel (0) target = $region17
  $region16: #{_lambda_.12} parent=0 // pred_region
    _
  $region17: #{_lambda_.12} parent=0 // pred_fallthru
    _
  // Predicated region
  $region18: #{_lambda_.12} parent=0 // pred_check
    _
  $region19: #{_lambda_.12} parent=0 // pred_check_branch
    %70 = sbr.rel (0) target = $region21
  $region20: #{_lambda_.12} parent=0 // pred_region
    _
  $region21: #{_lambda_.12} parent=0 // pred_fallthru
    _

// kernel: _lambda_.13
$region0: #{_lambda_.13}
  #allocation0 [shape = 'u32[]', space=smem, size = 0x4, offset = 0x4, fixed_abs, tag = 'smem constant byte address 0x4 - core index']
  #allocation1 [shape = 'u32[144,128]{1,0:T(1,128)}', space=vmem, size = 0x12000, scoped, tag = 'internal scratch']
  %s0 = inlined_call_operand.vmem [shape: bf16[16,128], index: 0, kind: input, shape index: {}]
  %s1 = inlined_call_operand.vmem [shape: bf16[128,384], index: 1, kind: input, shape index: {}]
  %s2 = inlined_call_operand.vmem [shape: f32[1,384], index: 2, kind: input, shape index: {}]
  %s3 = inlined_call_operand.vmem [shape: bf16[16,384], index: 3, kind: output, shape index: {}]
  %s4 = sld [smem:[#allocation0]]
  $region22: #{_lambda_.13} parent=0
    _
  %s6 = ssub.s32 1, %s4
  %s7 = scalar_select 0, %s6, %s4
  // Predicated region
  $region2: #{_lambda_.13} parent=0 // pred_check
    _
  $region3: #{_lambda_.13} parent=0 // pred_check_branch
    %9 = sbr.rel (0) target = $region5
  $region4: #{_lambda_.13} parent=0 // pred_region
    _
  $region5: #{_lambda_.13} parent=0 // pred_fallthru
    _
  // Predicated region
  $region6: #{_lambda_.13} parent=0 // pred_check
    _
  $region7: #{_lambda_.13} parent=0 // pred_check_branch
    %11 = sbr.rel (0) target = $region9
  $region8: #{_lambda_.13} parent=0 // pred_region
    _
  $region9: #{_lambda_.13} parent=0 // pred_fallthru
    _
  // Predicated region
  $region10: #{_lambda_.13} parent=0 // pred_check
    _
  $region11: #{_lambda_.13} parent=0 // pred_check_branch
    %13 = sbr.rel (0) target = $region13
  $region12: #{_lambda_.13} parent=0 // pred_region
    _
  $region13: #{_lambda_.13} parent=0 // pred_fallthru
    _
  %v15 = vld [vmem:[%s0] sm:$0xf]
  %v16 = vld [vmem:[%s0 + $0x4] sm:$0xf]
  %v17 = vld [vmem:[%s1] sm:$0xff]
  %v18 = vld [vmem:[%s1 + $0x8] sm:$0xf]
  %v19 = vld [vmem:[%s1 + $0xc] sm:$0xff]
  %v20 = vld [vmem:[%s1 + $0x14] sm:$0xf]
  %v21 = vld [vmem:[%s1 + $0x18] sm:$0xff]
  %v22 = vld [vmem:[%s1 + $0x20] sm:$0xf]
  %v23 = vld [vmem:[%s1 + $0x24] sm:$0xff]
  %v24 = vld [vmem:[%s1 + $0x2c] sm:$0xf]
  %v25 = vld [vmem:[%s1 + $0x30] sm:$0xff]
  %v26 = vld [vmem:[%s1 + $0x38] sm:$0xf]
  %v27 = vld [vmem:[%s1 + $0x3c] sm:$0xff]
  %v28 = vld [vmem:[%s1 + $0x44] sm:$0xf]
  %v29 = vld [vmem:[%s1 + $0x48] sm:$0xff]
  %v30 = vld [vmem:[%s1 + $0x50] sm:$0xf]
  %v31 = vld [vmem:[%s1 + $0x54] sm:$0xff]
  %v32 = vld [vmem:[%s1 + $0x5c] sm:$0xf]
  %v33 = vld [vmem:[%s1 + $0x60] sm:$0xff]
  %v34 = vld [vmem:[%s1 + $0x68] sm:$0xf]
  %v35 = vld [vmem:[%s1 + $0x6c] sm:$0xff]
  %v36 = vld [vmem:[%s1 + $0x74] sm:$0xf]
  %v37 = vld [vmem:[%s1 + $0x78] sm:$0xff]
  %v38 = vld [vmem:[%s1 + $0x80] sm:$0xf]
  %v39 = vld [vmem:[%s1 + $0x84] sm:$0xff]
  %v40 = vld [vmem:[%s1 + $0x8c] sm:$0xf]
  %v41 = vld [vmem:[%s1 + $0x90] sm:$0xff]
  %v42 = vld [vmem:[%s1 + $0x98] sm:$0xf]
  %v43 = vld [vmem:[%s1 + $0x9c] sm:$0xff]
  %v44 = vld [vmem:[%s1 + $0xa4] sm:$0xf]
  %v45 = vld [vmem:[%s1 + $0xa8] sm:$0xff]
  %v46 = vld [vmem:[%s1 + $0xb0] sm:$0xf]
  %v47 = vld [vmem:[%s1 + $0xb4] sm:$0xff]
  %v48 = vld [vmem:[%s1 + $0xbc] sm:$0xf]
  %v49 = vld [vmem:[%s2] sm:$0x7]
  %v51 = vlaneseq
  %v52 = vshrl.u32 %v51, 7
  %v53 = vsub.s32 0, %v52
  %v54 = vrot.slane %v49, %v53
  %v55 = vlaneseq
  %v56 = vshrl.u32 %v55, 7
  %v57 = vsub.s32 1, %v56
  %v58 = vrot.slane %v49, %v57
  %v59 = vlaneseq
  %v60 = vshrl.u32 %v59, 7
  %v61 = vsub.s32 2, %v60
  %v62 = vrot.slane %v49, %v61
  %v68 = vunpack.c.l.b16 %v15
  %v69 = vunpack.c.l.b16 %v16
  %v70 = vpack.c.b16 %v69, %v68
  %v104 = vunpack.c.l.b16 %v17
  %v105 = vunpack.c.h.b16 %v17
  %v106 = vunpack.c.l.b16 %v18
  %v107 = vunpack.c.l.b16 %v19
  %v108 = vunpack.c.h.b16 %v19
  %v109 = vunpack.c.l.b16 %v20
  %v110 = vunpack.c.l.b16 %v21
  %v111 = vunpack.c.h.b16 %v21
  %v112 = vunpack.c.l.b16 %v22
  %v113 = vunpack.c.l.b16 %v23
  %v114 = vunpack.c.h.b16 %v23
  %v115 = vunpack.c.l.b16 %v24
  %v116 = vunpack.c.l.b16 %v25
  %v117 = vunpack.c.h.b16 %v25
  %v118 = vunpack.c.l.b16 %v26
  %v119 = vunpack.c.l.b16 %v27
  %v120 = vunpack.c.h.b16 %v27
  %v121 = vunpack.c.l.b16 %v28
  %v122 = vunpack.c.l.b16 %v29
  %v123 = vunpack.c.h.b16 %v29
  %v124 = vunpack.c.l.b16 %v30
  %v125 = vunpack.c.l.b16 %v31
  %v126 = vunpack.c.h.b16 %v31
  %v127 = vunpack.c.l.b16 %v32
  %v128 = vunpack.c.l.b16 %v33
  %v129 = vunpack.c.h.b16 %v33
  %v130 = vunpack.c.l.b16 %v34
  %v131 = vunpack.c.l.b16 %v35
  %v132 = vunpack.c.h.b16 %v35
  %v133 = vunpack.c.l.b16 %v36
  %v134 = vunpack.c.l.b16 %v37
  %v135 = vunpack.c.h.b16 %v37
  %v136 = vunpack.c.l.b16 %v38
  %v137 = vunpack.c.l.b16 %v39
  %v138 = vunpack.c.h.b16 %v39
  %v139 = vunpack.c.l.b16 %v40
  %v140 = vunpack.c.l.b16 %v41
  %v141 = vunpack.c.h.b16 %v41
  %v142 = vunpack.c.l.b16 %v42
  %v143 = vunpack.c.l.b16 %v43
  %v144 = vunpack.c.h.b16 %v43
  %v145 = vunpack.c.l.b16 %v44
  %v146 = vunpack.c.l.b16 %v45
  %v147 = vunpack.c.h.b16 %v45
  %v148 = vunpack.c.l.b16 %v46
  %v149 = vunpack.c.l.b16 %v47
  %v150 = vunpack.c.h.b16 %v47
  %v151 = vunpack.c.l.b16 %v48
  %v152 = vpack.c.b16 %v107, %v104
  %v153 = vpack.c.b16 %v108, %v105
  %v154 = vpack.c.b16 %v109, %v106
  %v155 = vpack.c.b16 %v113, %v110
  %v156 = vpack.c.b16 %v114, %v111
  %v157 = vpack.c.b16 %v115, %v112
  %v158 = vpack.c.b16 %v119, %v116
  %v159 = vpack.c.b16 %v120, %v117
  %v160 = vpack.c.b16 %v121, %v118
  %v161 = vpack.c.b16 %v125, %v122
  %v162 = vpack.c.b16 %v126, %v123
  %v163 = vpack.c.b16 %v127, %v124
  %v164 = vpack.c.b16 %v131, %v128
  %v165 = vpack.c.b16 %v132, %v129
  %v166 = vpack.c.b16 %v133, %v130
  %v167 = vpack.c.b16 %v137, %v134
  %v168 = vpack.c.b16 %v138, %v135
  %v169 = vpack.c.b16 %v139, %v136
  %v170 = vpack.c.b16 %v143, %v140
  %v171 = vpack.c.b16 %v144, %v141
  %v172 = vpack.c.b16 %v145, %v142
  %v173 = vpack.c.b16 %v149, %v146
  %v174 = vpack.c.b16 %v150, %v147
  %v175 = vpack.c.b16 %v151, %v148
  %200 = vmatprep.subr.bf16.mxu0 %v153
  %201 = vmatpush1.bf16.msra.mxu0 %v152
  %202 = vmatprep.subr.bf16.mxu0 %v156
  %203 = vmatpush1.bf16.msra.mxu0 %v155
  %204 = vmatprep.subr.bf16.mxu0 %v159
  %205 = vmatpush1.bf16.msra.mxu0 %v158
  %206 = vmatprep.subr.bf16.mxu0 %v162
  %207 = vmatpush1.bf16.msra.mxu0 %v161
  %208 = vmatprep.subr.bf16.mxu0 %v165
  %209 = vmatpush1.bf16.msra.mxu0 %v164
  %210 = vmatprep.subr.bf16.mxu0 %v168
  %211 = vmatpush1.bf16.msra.mxu0 %v167
  %212 = vmatprep.subr.bf16.mxu0 %v171
  %213 = vmatpush1.bf16.msra.mxu0 %v170
  %214 = vmatprep.subr.bf16.mxu0 %v174
  %215 = vmatpush1.bf16.msra.mxu0 %v173
  %216 = vmatprep.subr.bf16.mxu0 0
  %217 = vmatpush1.bf16.msra.mxu0 0
  %218 = vmatprep.subr.bf16.mxu0 0
  %219 = vmatpush1.bf16.msra.mxu0 0
  %220 = vmatprep.subr.bf16.mxu0 0
  %221 = vmatpush1.bf16.msra.mxu0 0
  %222 = vmatprep.subr.bf16.mxu0 0
  %223 = vmatpush1.bf16.msra.mxu0 0
  %224 = vmatprep.subr.bf16.mxu0 0
  %225 = vmatpush1.bf16.msra.mxu0 0
  %226 = vmatprep.subr.bf16.mxu0 0
  %227 = vmatpush1.bf16.msra.mxu0 0
  %228 = vmatprep.subr.bf16.mxu0 0
  %229 = vmatpush1.bf16.msra.mxu0 0
  %230 = vmatprep.subr.bf16.mxu0 0
  %231 = vmatpush1.bf16.msra.mxu0 0
  %232 = vmatprep.mubr.bf16.mxu0 0
  %233 = vmatmul.mubr.bf16.gmra.mrb[0].mxu0 %v70
  %v234 = vpop.f32.mrb[0].mxu0
  %v235 = vadd.f32 %v54, %v234
  %v236 = vpop.f32.mrb[0].mxu0
  %v237 = vadd.f32 %v58, %v236
  %v238 = vpop.f32.mrb[0].mxu0
  %v239 = vadd.f32 %v54, %v238
  %v240 = vpop.f32.mrb[0].mxu0
  %v241 = vadd.f32 %v58, %v240
  %242 = vdwg.mxu0
  %243 = vmatprep.subr.bf16.mxu0 0
  %244 = vmatpush1.bf16.msra.mxu0 %v154
  %245 = vmatprep.subr.bf16.mxu0 0
  %246 = vmatpush1.bf16.msra.mxu0 %v157
  %247 = vmatprep.subr.bf16.mxu0 0
  %248 = vmatpush1.bf16.msra.mxu0 %v160
  %249 = vmatprep.subr.bf16.mxu0 0
  %250 = vmatpush1.bf16.msra.mxu0 %v163
  %251 = vmatprep.subr.bf16.mxu0 0
  %252 = vmatpush1.bf16.msra.mxu0 %v166
  %253 = vmatprep.subr.bf16.mxu0 0
  %254 = vmatpush1.bf16.msra.mxu0 %v169
  %255 = vmatprep.subr.bf16.mxu0 0
  %256 = vmatpush1.bf16.msra.mxu0 %v172
  %257 = vmatprep.subr.bf16.mxu0 0
  %258 = vmatpush1.bf16.msra.mxu0 %v175
  %259 = vmatprep.subr.bf16.mxu0 0
  %260 = vmatpush1.bf16.msra.mxu0 0
  %261 = vmatprep.subr.bf16.mxu0 0
  %262 = vmatpush1.bf16.msra.mxu0 0
  %263 = vmatprep.subr.bf16.mxu0 0
  %264 = vmatpush1.bf16.msra.mxu0 0
  %265 = vmatprep.subr.bf16.mxu0 0
  %266 = vmatpush1.bf16.msra.mxu0 0
  %267 = vmatprep.subr.bf16.mxu0 0
  %268 = vmatpush1.bf16.msra.mxu0 0
  %269 = vmatprep.subr.bf16.mxu0 0
  %270 = vmatpush1.bf16.msra.mxu0 0
  %271 = vmatprep.subr.bf16.mxu0 0
  %272 = vmatpush1.bf16.msra.mxu0 0
  %273 = vmatprep.subr.bf16.mxu0 0
  %274 = vmatpush1.bf16.msra.mxu0 0
  %275 = vmatprep.mubr.bf16.mxu0 0
  %276 = vmatmul.mubr.bf16.gmra.mrb[0].mxu0 %v70
  %v277 = vpop.f32.mrb[0].mxu0
  %v278 = vadd.f32 %v62, %v277
  %v279 = vpop.f32.mrb[0].mxu0
  %v280 = vpop.f32.mrb[0].mxu0
  %v281 = vadd.f32 %v62, %v280
  %v282 = vpop.f32.mrb[0].mxu0
  %283 = vdwg.mxu0
  %v284 = vpack.c.bf16 %v239, %v235
  %v285 = vpack.c.bf16 %v241, %v237
  %v286 = vpack.c.bf16 %v281, %v278
  %v290 = vunpack.c.l.b16 %v284
  %v291 = vunpack.c.l.b16 %v285
  %v292 = vunpack.c.l.b16 %v286
  %v293 = vunpack.c.h.b16 %v284
  %v294 = vunpack.c.h.b16 %v285
  %v295 = vunpack.c.h.b16 %v286
  %v296 = vpack.c.b16 %v291, %v290
  %v297 = vpack.c.b16 %v292, %v292
  %v298 = vpack.c.b16 %v294, %v293
  %v299 = vpack.c.b16 %v295, %v295
  %304 = vst [vmem:[%s3] sm:$0xff] %v296
  %305 = vst [vmem:[%s3 + $0x8] sm:$0xf] %v297
  %306 = vst [vmem:[%s3 + $0xc] sm:$0xff] %v298
  %307 = vst [vmem:[%s3 + $0x14] sm:$0xf] %v299
  // Predicated region
  $region14: #{_lambda_.13} parent=0 // pred_check
    _
  $region15: #{_lambda_.13} parent=0 // pred_check_branch
    %309 = sbr.rel (0) target = $region17
  $region16: #{_lambda_.13} parent=0 // pred_region
    _
  $region17: #{_lambda_.13} parent=0 // pred_fallthru
    _
  // Predicated region
  $region18: #{_lambda_.13} parent=0 // pred_check
    _
  $region19: #{_lambda_.13} parent=0 // pred_check_branch
    %311 = sbr.rel (0) target = $region21
  $region20: #{_lambda_.13} parent=0 // pred_region
    _
  $region21: #{_lambda_.13} parent=0 // pred_fallthru
    _

// kernel: _lambda_.15
$region0: #{_lambda_.15}
  #allocation0 [shape = 'u32[]', space=smem, size = 0x4, offset = 0x4, fixed_abs, tag = 'smem constant byte address 0x4 - core index']
  #allocation1 [shape = 'u32[144,128]{1,0:T(1,128)}', space=vmem, size = 0x12000, scoped, tag = 'internal scratch']
  %s0 = inlined_call_operand.vmem [shape: bf16[16,128], index: 0, kind: input, shape index: {}]
  %s1 = inlined_call_operand.vmem [shape: bf16[128,128], index: 1, kind: input, shape index: {}]
  %s2 = inlined_call_operand.vmem [shape: f32[1,128], index: 2, kind: input, shape index: {}, may-alias: {2,5}]
  %s3 = inlined_call_operand.vmem [shape: bf16[16,128], index: 3, kind: input, shape index: {}]
  %s4 = inlined_call_operand.vmem [shape: f32[1,128], index: 4, kind: input, shape index: {}]
  %s5 = inlined_call_operand.vmem [shape: f32[1,128], index: 5, kind: input, shape index: {}, may-alias: {2,5}]
  %s6 = inlined_call_operand.vmem [shape: bf16[16,128], index: 6, kind: output, shape index: {}]
  %s7 = sld [smem:[#allocation0]]
  $region34: #{_lambda_.15} parent=0
    _
  %s9 = ssub.s32 1, %s7
  %s10 = scalar_select 0, %s9, %s7
  // Predicated region
  $region2: #{_lambda_.15} parent=0 // pred_check
    _
  $region3: #{_lambda_.15} parent=0 // pred_check_branch
    %12 = sbr.rel (0) target = $region5
  $region4: #{_lambda_.15} parent=0 // pred_region
    _
  $region5: #{_lambda_.15} parent=0 // pred_fallthru
    _
  // Predicated region
  $region6: #{_lambda_.15} parent=0 // pred_check
    _
  $region7: #{_lambda_.15} parent=0 // pred_check_branch
    %14 = sbr.rel (0) target = $region9
  $region8: #{_lambda_.15} parent=0 // pred_region
    _
  $region9: #{_lambda_.15} parent=0 // pred_fallthru
    _
  // Predicated region
  $region10: #{_lambda_.15} parent=0 // pred_check
    _
  $region11: #{_lambda_.15} parent=0 // pred_check_branch
    %16 = sbr.rel (0) target = $region13
  $region12: #{_lambda_.15} parent=0 // pred_region
    _
  $region13: #{_lambda_.15} parent=0 // pred_fallthru
    _
  // Predicated region
  $region14: #{_lambda_.15} parent=0 // pred_check
    _
  $region15: #{_lambda_.15} parent=0 // pred_check_branch
    %18 = sbr.rel (0) target = $region17
  $region16: #{_lambda_.15} parent=0 // pred_region
    _
  $region17: #{_lambda_.15} parent=0 // pred_fallthru
    _
  // Predicated region
  $region18: #{_lambda_.15} parent=0 // pred_check
    _
  $region19: #{_lambda_.15} parent=0 // pred_check_branch
    %20 = sbr.rel (0) target = $region21
  $region20: #{_lambda_.15} parent=0 // pred_region
    _
  $region21: #{_lambda_.15} parent=0 // pred_fallthru
    _
  // Predicated region
  $region22: #{_lambda_.15} parent=0 // pred_check
    _
  $region23: #{_lambda_.15} parent=0 // pred_check_branch
    %22 = sbr.rel (0) target = $region25
  $region24: #{_lambda_.15} parent=0 // pred_region
    _
  $region25: #{_lambda_.15} parent=0 // pred_fallthru
    _
  %v24 = vld [vmem:[%s0] sm:$0xf]
  %v25 = vld [vmem:[%s0 + $0x4] sm:$0xf]
  %v26 = vld [vmem:[%s1] sm:$0xf]
  %v27 = vld [vmem:[%s1 + $0x4] sm:$0xf]
  %v28 = vld [vmem:[%s1 + $0x8] sm:$0xf]
  %v29 = vld [vmem:[%s1 + $0xc] sm:$0xf]
  %v30 = vld [vmem:[%s1 + $0x10] sm:$0xf]
  %v31 = vld [vmem:[%s1 + $0x14] sm:$0xf]
  %v32 = vld [vmem:[%s1 + $0x18] sm:$0xf]
  %v33 = vld [vmem:[%s1 + $0x1c] sm:$0xf]
  %v34 = vld [vmem:[%s1 + $0x20] sm:$0xf]
  %v35 = vld [vmem:[%s1 + $0x24] sm:$0xf]
  %v36 = vld [vmem:[%s1 + $0x28] sm:$0xf]
  %v37 = vld [vmem:[%s1 + $0x2c] sm:$0xf]
  %v38 = vld [vmem:[%s1 + $0x30] sm:$0xf]
  %v39 = vld [vmem:[%s1 + $0x34] sm:$0xf]
  %v40 = vld [vmem:[%s1 + $0x38] sm:$0xf]
  %v41 = vld [vmem:[%s1 + $0x3c] sm:$0xf]
  %v42 = vld [vmem:[%s2] sm:$0x1]
  %v44 = vlaneseq
  %v45 = vshrl.u32 %v44, 7
  %v46 = vsub.s32 0, %v45
  %v47 = vrot.slane %v42, %v46
  %v51 = vunpack.c.l.b16 %v24
  %v52 = vunpack.c.l.b16 %v25
  %v53 = vpack.c.b16 %v52, %v51
  %v71 = vunpack.c.l.b16 %v26
  %v72 = vunpack.c.l.b16 %v27
  %v73 = vunpack.c.l.b16 %v28
  %v74 = vunpack.c.l.b16 %v29
  %v75 = vunpack.c.l.b16 %v30
  %v76 = vunpack.c.l.b16 %v31
  %v77 = vunpack.c.l.b16 %v32
  %v78 = vunpack.c.l.b16 %v33
  %v79 = vunpack.c.l.b16 %v34
  %v80 = vunpack.c.l.b16 %v35
  %v81 = vunpack.c.l.b16 %v36
  %v82 = vunpack.c.l.b16 %v37
  %v83 = vunpack.c.l.b16 %v38
  %v84 = vunpack.c.l.b16 %v39
  %v85 = vunpack.c.l.b16 %v40
  %v86 = vunpack.c.l.b16 %v41
  %v87 = vpack.c.b16 %v72, %v71
  %v88 = vpack.c.b16 %v74, %v73
  %v89 = vpack.c.b16 %v76, %v75
  %v90 = vpack.c.b16 %v78, %v77
  %v91 = vpack.c.b16 %v80, %v79
  %v92 = vpack.c.b16 %v82, %v81
  %v93 = vpack.c.b16 %v84, %v83
  %v94 = vpack.c.b16 %v86, %v85
  %103 = vmatprep.subr.bf16.mxu0 0
  %104 = vmatpush1.bf16.msra.mxu0 %v87
  %105 = vmatprep.subr.bf16.mxu0 0
  %106 = vmatpush1.bf16.msra.mxu0 %v88
  %107 = vmatprep.subr.bf16.mxu0 0
  %108 = vmatpush1.bf16.msra.mxu0 %v89
  %109 = vmatprep.subr.bf16.mxu0 0
  %110 = vmatpush1.bf16.msra.mxu0 %v90
  %111 = vmatprep.subr.bf16.mxu0 0
  %112 = vmatpush1.bf16.msra.mxu0 %v91
  %113 = vmatprep.subr.bf16.mxu0 0
  %114 = vmatpush1.bf16.msra.mxu0 %v92
  %115 = vmatprep.subr.bf16.mxu0 0
  %116 = vmatpush1.bf16.msra.mxu0 %v93
  %117 = vmatprep.subr.bf16.mxu0 0
  %118 = vmatpush1.bf16.msra.mxu0 %v94
  %119 = vmatprep.subr.bf16.mxu0 0
  %120 = vmatpush1.bf16.msra.mxu0 0
  %121 = vmatprep.subr.bf16.mxu0 0
  %122 = vmatpush1.bf16.msra.mxu0 0
  %123 = vmatprep.subr.bf16.mxu0 0
  %124 = vmatpush1.bf16.msra.mxu0 0
  %125 = vmatprep.subr.bf16.mxu0 0
  %126 = vmatpush1.bf16.msra.mxu0 0
  %127 = vmatprep.subr.bf16.mxu0 0
  %128 = vmatpush1.bf16.msra.mxu0 0
  %129 = vmatprep.subr.bf16.mxu0 0
  %130 = vmatpush1.bf16.msra.mxu0 0
  %131 = vmatprep.subr.bf16.mxu0 0
  %132 = vmatpush1.bf16.msra.mxu0 0
  %133 = vmatprep.subr.bf16.mxu0 0
  %134 = vmatpush1.bf16.msra.mxu0 0
  %135 = vmatprep.mubr.bf16.mxu0 0
  %136 = vmatmul.mubr.bf16.gmra.mrb[0].mxu0 %v53
  %v137 = vpop.f32.mrb[0].mxu0
  %v138 = vadd.f32 %v47, %v137
  %v139 = vpop.f32.mrb[0].mxu0
  %v140 = vpop.f32.mrb[0].mxu0
  %v141 = vadd.f32 %v47, %v140
  %v142 = vpop.f32.mrb[0].mxu0
  %143 = vdwg.mxu0
  %v144 = vld [vmem:[%s3] sm:$0xf]
  %v145 = vld [vmem:[%s3 + $0x4] sm:$0xf]
  %v146 = vunpack.c.l.bf16 %v144
  %v147 = vunpack.c.l.bf16 %v145
  %v148 = vadd.f32 %v138, %v146
  %v149 = vadd.f32 %v141, %v147
  %150 = vadd.xlane.f32.xlu0 %v148
  %v151 = vpop.xlane.xlu0 %150
  %152 = vadd.xlane.f32.xlu0 %v149
  %v153 = vpop.xlane.xlu0 %152
  %v154 = vrcp.pop 128.0
  %v155 = vmul.f32 %v151, %v154
  %v156 = vmul.f32 %v153, %v154
  %v157 = vsub.f32 %v148, %v155
  %v158 = vsub.f32 %v149, %v156
  %v159 = vmul.f32 %v157, %v157
  %v160 = vmul.f32 %v158, %v158
  %161 = vadd.xlane.f32.xlu0 %v159
  %v162 = vpop.xlane.xlu0 %161
  %163 = vadd.xlane.f32.xlu0 %v160
  %v164 = vpop.xlane.xlu0 %163
  %v165 = vmul.f32 %v162, %v154
  %v166 = vmul.f32 %v164, %v154
  %v167 = vadd.f32 %v165, 1e-12
  %v168 = vadd.f32 %v166, 1e-12
  %v169 = vrsqrt.pop %v167
  %v170 = vrsqrt.pop %v168
  %v171 = vmul.f32 %v157, %v169
  %v172 = vmul.f32 %v158, %v170
  %v173 = vld [vmem:[%s4] sm:$0x1]
  %v175 = vlaneseq
  %v176 = vshrl.u32 %v175, 7
  %v177 = vsub.s32 0, %v176
  %v178 = vrot.slane %v173, %v177
  %v180 = vmul.f32 %v171, %v178
  %v181 = vmul.f32 %v172, %v178
  %v182 = vld [vmem:[%s5] sm:$0x1]
  %v184 = vlaneseq
  %v185 = vshrl.u32 %v184, 7
  %v186 = vsub.s32 0, %v185
  %v187 = vrot.slane %v182, %v186
  %v189 = vadd.f32 %v180, %v187
  %v190 = vadd.f32 %v181, %v187
  %v191 = vpack.c.bf16 %v190, %v189
  %v193 = vunpack.c.l.b16 %v191
  %v194 = vunpack.c.h.b16 %v191
  %v195 = vpack.c.b16 %v193, %v193
  %v196 = vpack.c.b16 %v194, %v194
  %199 = vst [vmem:[%s6] sm:$0xf] %v195
  %200 = vst [vmem:[%s6 + $0x4] sm:$0xf] %v196
  // Predicated region
  $region26: #{_lambda_.15} parent=0 // pred_check
    _
  $region27: #{_lambda_.15} parent=0 // pred_check_branch
    %202 = sbr.rel (0) target = $region29
  $region28: #{_lambda_.15} parent=0 // pred_region
    _
  $region29: #{_lambda_.15} parent=0 // pred_fallthru
    _
  // Predicated region
  $region30: #{_lambda_.15} parent=0 // pred_check
    _
  $region31: #{_lambda_.15} parent=0 // pred_check_branch
    %204 = sbr.rel (0) target = $region33
  $region32: #{_lambda_.15} parent=0 // pred_region
    _
  $region33: #{_lambda_.15} parent=0 // pred_fallthru
    _

// kernel: _lambda_.14
$region0: #{_lambda_.14}
  #allocation0 [shape = 'u32[]', space=smem, size = 0x4, offset = 0x4, fixed_abs, tag = 'smem constant byte address 0x4 - core index']
  #allocation1 [shape = 'u32[144,128]{1,0:T(1,128)}', space=vmem, size = 0x12000, scoped, tag = 'internal scratch']
  %s0 = inlined_call_operand.vmem [shape: bf16[2,8,384], index: 0, kind: input, shape index: {}, may-alias: {0,1,2}]
  %s1 = inlined_call_operand.vmem [shape: bf16[2,8,384], index: 1, kind: input, shape index: {}, may-alias: {0,1,2}]
  %s2 = inlined_call_operand.vmem [shape: bf16[2,8,384], index: 2, kind: input, shape index: {}, may-alias: {0,1,2}]
  %s3 = inlined_call_operand.vmem [shape: f32[2,1,8], index: 3, kind: input, shape index: {}]
  %s4 = inlined_call_operand.vmem [shape: bf16[2,8,128], index: 4, kind: output, shape index: {}]
  %s5 = sld [smem:[#allocation0]]
  $region49: #{_lambda_.14} parent=0
    _
  %s7 = ssub.s32 1, %s5
  %s8 = scalar_select 0, %s7, %s5
  loop: start=0, step=1, limit=4
  $region2: #{_lambda_.14} parent=0 // loop_pre_header
    _
  $region3: #{_lambda_.14} parent=0 // loop_header
    %s10 = sphi 0, %s14
    %p11 = scmp.ge.s32.totalorder %s10, 4
    %s17 = sphi 0, %s29
    %s18 = sphi 0, %s25
    %s19 = sphi 0, %s17
    %s20 = sphi 0, %s18
    %s21 = sphi 0, %s19
    %s22 = sphi 0, %s20
    %s34 = sphi 0, %s36
    %s37 = sphi 0, %s34
    %s38 = sphi 0, %s37
    %s54 = sphi 0, %s38
    %s64 = sphi 0, %s66
    %s67 = sphi 0, %s64
    %s68 = sphi 0, %s67
    %s84 = sphi 0, %s68
    %s94 = sphi 0, %s96
    %s97 = sphi 0, %s94
    %s98 = sphi 0, %s97
    %s114 = sphi 0, %s98
    %s120 = sphi 0, %s122
    %s123 = sphi 0, %s120
    %s124 = sphi 0, %s123
    %s140 = sphi 0, %s124
    %s148 = sphi 0, %s150
    %s151 = sphi 0, %s148
    %s152 = sphi 0, %s151
    %s168 = sphi 0, %s152
  $region4: #{_lambda_.14} parent=0 // loop_header_branch
    %13 = sbr.rel (%p11) target = $region8
  $region5: #{_lambda_.14} parent=0 // loop_body
    %s15 = ssub.s32 %s10, 1
    %s16 = ssub.s32 %s10, 2
    %s23 = sadd.s32 1, %s18
    %p24 = scmp.ge.s32.totalorder %s23, 1
    %s25 = scalar_select %p24, 0, %s23
    %s26 = sadd.s32 1, %s17
    %s27 = scalar_select %p24, %s26, %s17
    %p28 = scmp.ge.s32.totalorder %s27, 2
    %s29 = scalar_select %p28, 0, %s27
    %s30 = ssub.s32 %s17, %s29
    %s31 = ssub.s32 %s18, %s25
    %s32 = sor.u32 %s30, %s31
    %p33 = scmp.eq.s32.totalorder %s32, 0
    %s35 = sadd.s32 %s34, 1
    %s36 = scalar_select %p33, %s34, %s35
    %p39 = pneg %p33
    %p40 = scmp.eq.s32.totalorder %s10, 1
    %p41 = por %p39, %p40
    %p42 = scmp.ne.s32.totalorder %s34, %s37
    %p43 = scmp.eq.s32.totalorder %s10, 0
    %p44 = por %p42, %p43
    %p45 = scmp.ne.s32.totalorder %s34, %s37
    %p46 = scmp.eq.s32.totalorder %s15, 1
    %p47 = por %p45, %p46
    %p48 = scmp.ne.s32.totalorder %s37, %s38
    %p49 = scmp.eq.s32.totalorder %s15, 0
    %p50 = por %p48, %p49
    %p51 = scmp.ne.s32.totalorder %s37, %s38
    %p52 = scmp.eq.s32.totalorder %s16, 1
    %p53 = por %p51, %p52
    %p55 = scmp.ne.s32.totalorder %s38, %s54
    %p56 = scmp.eq.s32.totalorder %s16, 0
    %p57 = por %p55, %p56
    %s58 = sadd.s32 %s18, 1
    %s59 = sadd.s32 %s25, 1
    %s60 = ssub.s32 %s17, %s29
    %s61 = ssub.s32 %s58, %s59
    %s62 = sor.u32 %s60, %s61
    %p63 = scmp.eq.s32.totalorder %s62, 0
    %s65 = sadd.s32 %s64, 1
    %s66 = scalar_select %p63, %s64, %s65
    %p69 = pneg %p63
    %p70 = scmp.eq.s32.totalorder %s10, 1
    %p71 = por %p69, %p70
    %p72 = scmp.ne.s32.totalorder %s64, %s67
    %p73 = scmp.eq.s32.totalorder %s10, 0
    %p74 = por %p72, %p73
    %p75 = scmp.ne.s32.totalorder %s64, %s67
    %p76 = scmp.eq.s32.totalorder %s15, 1
    %p77 = por %p75, %p76
    %p78 = scmp.ne.s32.totalorder %s67, %s68
    %p79 = scmp.eq.s32.totalorder %s15, 0
    %p80 = por %p78, %p79
    %p81 = scmp.ne.s32.totalorder %s67, %s68
    %p82 = scmp.eq.s32.totalorder %s16, 1
    %p83 = por %p81, %p82
    %p85 = scmp.ne.s32.totalorder %s68, %s84
    %p86 = scmp.eq.s32.totalorder %s16, 0
    %p87 = por %p85, %p86
    %s88 = sadd.s32 %s18, 2
    %s89 = sadd.s32 %s25, 2
    %s90 = ssub.s32 %s17, %s29
    %s91 = ssub.s32 %s88, %s89
    %s92 = sor.u32 %s90, %s91
    %p93 = scmp.eq.s32.totalorder %s92, 0
    %s95 = sadd.s32 %s94, 1
    %s96 = scalar_select %p93, %s94, %s95
    %p99 = pneg %p93
    %p100 = scmp.eq.s32.totalorder %s10, 1
    %p101 = por %p99, %p100
    %p102 = scmp.ne.s32.totalorder %s94, %s97
    %p103 = scmp.eq.s32.totalorder %s10, 0
    %p104 = por %p102, %p103
    %p105 = scmp.ne.s32.totalorder %s94, %s97
    %p106 = scmp.eq.s32.totalorder %s15, 1
    %p107 = por %p105, %p106
    %p108 = scmp.ne.s32.totalorder %s97, %s98
    %p109 = scmp.eq.s32.totalorder %s15, 0
    %p110 = por %p108, %p109
    %p111 = scmp.ne.s32.totalorder %s97, %s98
    %p112 = scmp.eq.s32.totalorder %s16, 1
    %p113 = por %p111, %p112
    %p115 = scmp.ne.s32.totalorder %s98, %s114
    %p116 = scmp.eq.s32.totalorder %s16, 0
    %p117 = por %p115, %p116
    %s118 = ssub.s32 %s17, %s29
    %p119 = scmp.eq.s32.totalorder %s118, 0
    %s121 = sadd.s32 %s120, 1
    %s122 = scalar_select %p119, %s120, %s121
    %p125 = pneg %p119
    %p126 = scmp.eq.s32.totalorder %s10, 1
    %p127 = por %p125, %p126
    %p128 = scmp.ne.s32.totalorder %s120, %s123
    %p129 = scmp.eq.s32.totalorder %s10, 0
    %p130 = por %p128, %p129
    %p131 = scmp.ne.s32.totalorder %s120, %s123
    %p132 = scmp.eq.s32.totalorder %s15, 1
    %p133 = por %p131, %p132
    %p134 = scmp.ne.s32.totalorder %s123, %s124
    %p135 = scmp.eq.s32.totalorder %s15, 0
    %p136 = por %p134, %p135
    %p137 = scmp.ne.s32.totalorder %s123, %s124
    %p138 = scmp.eq.s32.totalorder %s16, 1
    %p139 = por %p137, %p138
    %p141 = scmp.ne.s32.totalorder %s124, %s140
    %p142 = scmp.eq.s32.totalorder %s16, 0
    %p143 = por %p141, %p142
    %s144 = ssub.s32 %s17, %s29
    %s145 = ssub.s32 %s18, %s25
    %s146 = sor.u32 %s144, %s145
    %p147 = scmp.eq.s32.totalorder %s146, 0
    %s149 = sadd.s32 %s148, 1
    %s150 = scalar_select %p147, %s148, %s149
    %p153 = pneg %p147
    %p154 = scmp.eq.s32.totalorder %s10, 1
    %p155 = por %p153, %p154
    %p156 = scmp.ne.s32.totalorder %s148, %s151
    %p157 = scmp.eq.s32.totalorder %s10, 0
    %p158 = por %p156, %p157
    %p159 = scmp.ne.s32.totalorder %s148, %s151
    %p160 = scmp.eq.s32.totalorder %s15, 1
    %p161 = por %p159, %p160
    %p162 = scmp.ne.s32.totalorder %s151, %s152
    %p163 = scmp.eq.s32.totalorder %s15, 0
    %p164 = por %p162, %p163
    %p165 = scmp.ne.s32.totalorder %s151, %s152
    %p166 = scmp.eq.s32.totalorder %s16, 1
    %p167 = por %p165, %p166
    %p169 = scmp.ne.s32.totalorder %s152, %s168
    %p170 = scmp.eq.s32.totalorder %s16, 0
    %p171 = por %p169, %p170
    %p172 = scmp.le.s32.totalorder 1, %s10
    %p173 = scmp.lt.s32.totalorder %s10, 3
    %p174 = pnand %p172, %p173
    %p175 = pneg %p174
    // Predicated region
    $region9: #{_lambda_.14} parent=5 // pred_check
      _
    $region10: #{_lambda_.14} parent=5 // pred_check_branch
      %177 = sbr.rel (%p174) target = $region12
    $region11: #{_lambda_.14} parent=5 // pred_region
      %s178 = ssub.s32 %s10, 1
    $region12: #{_lambda_.14} parent=5 // pred_fallthru
      _
    %p179 = scmp.lt.s32.totalorder %s10, 2
    // Predicated region
    $region13: #{_lambda_.14} parent=5 // pred_check
      %p180 = pneg %p179
    $region14: #{_lambda_.14} parent=5 // pred_check_branch
      %182 = sbr.rel (%p180) target = $region16
    $region15: #{_lambda_.14} parent=5 // pred_region
      // Predicated region
      $region17: #{_lambda_.14} parent=15 // pred_check
        %p183 = pneg %p44
      $region18: #{_lambda_.14} parent=15 // pred_check_branch
        %185 = sbr.rel (%p183) target = $region20
      $region19: #{_lambda_.14} parent=15 // pred_region
        %p186 = scmp.lt.s32.totalorder %s17, 1
        %s187 = scalar_select %p186, %s17, 1
        %p188 = scmp.lt.s32.totalorder %s18, 2
        %s189 = scalar_select %p188, %s18, 2
        %s190 = smul.addr %s187, 3
        %s191 = sadd.s32 %s189, %s190
        %s192 = smul.addr %s191, 4
        %s193 = scalar_lea.vmem %s0, %s192
      $region20: #{_lambda_.14} parent=15 // pred_fallthru
        _
      // Predicated region
      $region21: #{_lambda_.14} parent=15 // pred_check
        %p194 = pneg %p74
      $region22: #{_lambda_.14} parent=15 // pred_check_branch
        %196 = sbr.rel (%p194) target = $region24
      $region23: #{_lambda_.14} parent=15 // pred_region
        %s197 = sadd.s32 %s18, 1
        %p198 = scmp.lt.s32.totalorder %s17, 1
        %s199 = scalar_select %p198, %s17, 1
        %p200 = scmp.lt.s32.totalorder %s197, 2
        %s201 = scalar_select %p200, %s197, 2
        %s202 = smul.addr %s199, 3
        %s203 = sadd.s32 %s201, %s202
        %s204 = smul.addr %s203, 4
        %s205 = scalar_lea.vmem %s1, %s204
        %s206 = sadd.s32 %s18, 1
      $region24: #{_lambda_.14} parent=15 // pred_fallthru
        _
      // Predicated region
      $region25: #{_lambda_.14} parent=15 // pred_check
        %p207 = pneg %p104
      $region26: #{_lambda_.14} parent=15 // pred_check_branch
        %209 = sbr.rel (%p207) target = $region28
      $region27: #{_lambda_.14} parent=15 // pred_region
        %s210 = sadd.s32 %s18, 2
        %p211 = scmp.lt.s32.totalorder %s17, 1
        %s212 = scalar_select %p211, %s17, 1
        %p213 = scmp.lt.s32.totalorder %s210, 2
        %s214 = scalar_select %p213, %s210, 2
        %s215 = smul.addr %s212, 3
        %s216 = sadd.s32 %s214, %s215
        %s217 = smul.addr %s216, 4
        %s218 = scalar_lea.vmem %s2, %s217
        %s219 = sadd.s32 %s18, 2
      $region28: #{_lambda_.14} parent=15 // pred_fallthru
        _
      // Predicated region
      $region29: #{_lambda_.14} parent=15 // pred_check
        %p220 = pneg %p130
      $region30: #{_lambda_.14} parent=15 // pred_check_branch
        %222 = sbr.rel (%p220) target = $region32
      $region31: #{_lambda_.14} parent=15 // pred_region
        %p223 = scmp.lt.s32.totalorder %s17, 1
        %s224 = scalar_select %p223, %s17, 1
        %s225 = scalar_lea.vmem %s3, %s224
      $region32: #{_lambda_.14} parent=15 // pred_fallthru
        _
    $region16: #{_lambda_.14} parent=5 // pred_fallthru
      _
    %p226 = scmp.le.s32.totalorder 1, %s10
    %p227 = scmp.lt.s32.totalorder %s10, 3
    %p228 = pnand %p226, %p227
    %p229 = pneg %p228
    // Predicated region
    $region33: #{_lambda_.14} parent=5 // pred_check
      _
    $region34: #{_lambda_.14} parent=5 // pred_check_branch
      %231 = sbr.rel (%p228) target = $region36
    $region35: #{_lambda_.14} parent=5 // pred_region
      %s232 = ssub.s32 %s10, 1
      %p233 = scmp.lt.s32.totalorder %s19, 1
      %s234 = scalar_select %p233, %s19, 1
      %p235 = scmp.lt.s32.totalorder %s20, 2
      %s236 = scalar_select %p235, %s20, 2
      %s237 = smul.addr %s234, 3
      %s238 = sadd.s32 %s236, %s237
      %s239 = smul.addr %s238, 4
      %s240 = scalar_lea.vmem %s0, %s239
      %p241 = pneg %p50
      %p242 = pneg %p47
      %s243 = sadd.s32 %s20, 1
      %p244 = scmp.lt.s32.totalorder %s19, 1
      %s245 = scalar_select %p244, %s19, 1
      %p246 = scmp.lt.s32.totalorder %s243, 2
      %s247 = scalar_select %p246, %s243, 2
      %s248 = smul.addr %s245, 3
      %s249 = sadd.s32 %s247, %s248
      %s250 = smul.addr %s249, 4
      %s251 = scalar_lea.vmem %s1, %s250
      %p252 = pneg %p80
      %p253 = pneg %p77
      %s254 = sadd.s32 %s20, 2
      %p255 = scmp.lt.s32.totalorder %s19, 1
      %s256 = scalar_select %p255, %s19, 1
      %p257 = scmp.lt.s32.totalorder %s254, 2
      %s258 = scalar_select %p257, %s254, 2
      %s259 = smul.addr %s256, 3
      %s260 = sadd.s32 %s258, %s259
      %s261 = smul.addr %s260, 4
      %s262 = scalar_lea.vmem %s2, %s261
      %p263 = pneg %p110
      %p264 = pneg %p107
      %p265 = scmp.lt.s32.totalorder %s19, 1
      %s266 = scalar_select %p265, %s19, 1
      %s267 = scalar_lea.vmem %s3, %s266
      %p268 = pneg %p136
      %p269 = pneg %p133
      %p270 = pneg %p164
      %p271 = pneg %p161
      %p272 = scmp.lt.s32.totalorder %s19, 1
      %s273 = scalar_select %p272, %s19, 1
      %p274 = scmp.lt.s32.totalorder %s20, 0
      %s275 = scalar_select %p274, %s20, 0
      %s276 = sadd.s32 %s275, %s273
      %s277 = smul.addr %s276, 4
      %s278 = scalar_lea.vmem %s4, %s277
      %p279 = scmp.lt.s32.totalorder %s19, 1
      %s280 = scalar_select %p279, %s19, 1
      %p281 = scmp.lt.s32.totalorder %s20, 2
      %s282 = scalar_select %p281, %s20, 2
      %s283 = smul.addr %s280, 3
      %s284 = sadd.s32 %s282, %s283
      %s285 = smul.addr %s284, 4
      %s286 = scalar_lea.vmem %s0, %s285
      %s287 = sadd.s32 %s20, 1
      %p288 = scmp.lt.s32.totalorder %s19, 1
      %s289 = scalar_select %p288, %s19, 1
      %p290 = scmp.lt.s32.totalorder %s287, 2
      %s291 = scalar_select %p290, %s287, 2
      %s292 = smul.addr %s289, 3
      %s293 = sadd.s32 %s291, %s292
      %s294 = smul.addr %s293, 4
      %s295 = scalar_lea.vmem %s1, %s294
      %s296 = sadd.s32 %s20, 1
      %s297 = sadd.s32 %s20, 2
      %p298 = scmp.lt.s32.totalorder %s19, 1
      %s299 = scalar_select %p298, %s19, 1
      %p300 = scmp.lt.s32.totalorder %s297, 2
      %s301 = scalar_select %p300, %s297, 2
      %s302 = smul.addr %s299, 3
      %s303 = sadd.s32 %s301, %s302
      %s304 = smul.addr %s303, 4
      %s305 = scalar_lea.vmem %s2, %s304
      %s306 = sadd.s32 %s20, 2
      %p307 = scmp.lt.s32.totalorder %s19, 1
      %s308 = scalar_select %p307, %s19, 1
      %s309 = scalar_lea.vmem %s3, %s308
      %p310 = scmp.lt.s32.totalorder %s19, 1
      %s311 = scalar_select %p310, %s19, 1
      %p312 = scmp.lt.s32.totalorder %s20, 0
      %s313 = scalar_select %p312, %s20, 0
      %s314 = sadd.s32 %s313, %s311
      %s315 = smul.addr %s314, 4
      %s316 = scalar_lea.vmem %s4, %s315
      %v318 = vld [vmem:[%s286] sm:$0xf]
      %v319 = vld [vmem:[%s295] sm:$0xf]
      %v320 = vld [vmem:[%s305] sm:$0xf]
      %v321 = vld [vmem:[%s309] sm:$0x1]
      %v323 = vlaneseq
      %v324 = vshrl.u32 %v323, 7
      %v325 = vsub.s32 0, %v324
      %v326 = vrot.slane %v321, %v325
      %vm328 = vcmask 261120
      %v330 = vsel %vm328, %v318, 0
      %v333 = vsel %vm328, %v319, 0
      %335 = vmatprep.subr.bf16.mxu0 0
      %336 = vmatpush1.bf16.xpose.msra.mxu0 %v333
      %337 = vmatprep.subr.bf16.mxu0 0
      %338 = vmatpush1.bf16.xpose.msra.mxu0 0
      %339 = vmatprep.subr.bf16.mxu0 0
      %340 = vmatpush1.bf16.xpose.msra.mxu0 0
      %341 = vmatprep.subr.bf16.mxu0 0
      %342 = vmatpush1.bf16.xpose.msra.mxu0 0
      %343 = vmatprep.subr.bf16.mxu0 0
      %344 = vmatpush1.bf16.xpose.msra.mxu0 0
      %345 = vmatprep.subr.bf16.mxu0 0
      %346 = vmatpush1.bf16.xpose.msra.mxu0 0
      %347 = vmatprep.subr.bf16.mxu0 0
      %348 = vmatpush1.bf16.xpose.msra.mxu0 0
      %349 = vmatprep.subr.bf16.mxu0 0
      %350 = vmatpush1.bf16.xpose.msra.mxu0 0
      %351 = vmatprep.subr.bf16.mxu0 0
      %352 = vmatpush1.bf16.xpose.msra.mxu0 0
      %353 = vmatprep.subr.bf16.mxu0 0
      %354 = vmatpush1.bf16.xpose.msra.mxu0 0
      %355 = vmatprep.subr.bf16.mxu0 0
      %356 = vmatpush1.bf16.xpose.msra.mxu0 0
      %357 = vmatprep.subr.bf16.mxu0 0
      %358 = vmatpush1.bf16.xpose.msra.mxu0 0
      %359 = vmatprep.subr.bf16.mxu0 0
      %360 = vmatpush1.bf16.xpose.msra.mxu0 0
      %361 = vmatprep.subr.bf16.mxu0 0
      %362 = vmatpush1.bf16.xpose.msra.mxu0 0
      %363 = vmatprep.subr.bf16.mxu0 0
      %364 = vmatpush1.bf16.xpose.msra.mxu0 0
      %365 = vmatprep.subr.bf16.mxu0 0
      %366 = vmatpush1.bf16.xpose.msra.mxu0 0
      %367 = vmatprep.mubr.bf16.mxu0 0
      %368 = vmatmul.mubr.bf16.gmra.mrb[0].mxu0 %v330
      %v369 = vpop.f32.mrb[0].mxu0
      %v370 = vadd.f32 %v326, %v369
      %v371 = vpop.f32.mrb[0].mxu0
      %v372 = vpop.f32.mrb[0].mxu0
      %v373 = vpop.f32.mrb[0].mxu0
      %374 = vdwg.mxu0
      %vm375 = vcmask 64512
      %v376 = vsel %vm375, %v370, -inf
      %377 = vmax.xlane.f32.xlu0 %v376
      %v378 = vpop.xlane.xlu0 %377
      %v379 = vsub.f32 %v370, %v378
      %v380 = vmul.f32 %v379, 1.442695
      %v381 = vpow.pop %v380
      %v382 = vsel %vm375, %v381, 0.0
      %383 = vadd.xlane.f32.xlu0 %v382
      %v384 = vpop.xlane.xlu0 %383
      %v385 = vpack.c.bf16 %v381, %v381
      %v387 = vsel %vm375, %v385, 0
      %vm389 = vcmask 1043456
      %v391 = vsel %vm389, %v320, 0
      %393 = vmatprep.subr.bf16.mxu0 0
      %394 = vmatpush1.bf16.msra.mxu0 %v391
      %395 = vmatprep.subr.bf16.mxu0 0
      %396 = vmatpush1.bf16.msra.mxu0 0
      %397 = vmatprep.subr.bf16.mxu0 0
      %398 = vmatpush1.bf16.msra.mxu0 0
      %399 = vmatprep.subr.bf16.mxu0 0
      %400 = vmatpush1.bf16.msra.mxu0 0
      %401 = vmatprep.subr.bf16.mxu0 0
      %402 = vmatpush1.bf16.msra.mxu0 0
      %403 = vmatprep.subr.bf16.mxu0 0
      %404 = vmatpush1.bf16.msra.mxu0 0
      %405 = vmatprep.subr.bf16.mxu0 0
      %406 = vmatpush1.bf16.msra.mxu0 0
      %407 = vmatprep.subr.bf16.mxu0 0
      %408 = vmatpush1.bf16.msra.mxu0 0
      %409 = vmatprep.subr.bf16.mxu0 0
      %410 = vmatpush1.bf16.msra.mxu0 0
      %411 = vmatprep.subr.bf16.mxu0 0
      %412 = vmatpush1.bf16.msra.mxu0 0
      %413 = vmatprep.subr.bf16.mxu0 0
      %414 = vmatpush1.bf16.msra.mxu0 0
      %415 = vmatprep.subr.bf16.mxu0 0
      %416 = vmatpush1.bf16.msra.mxu0 0
      %417 = vmatprep.subr.bf16.mxu0 0
      %418 = vmatpush1.bf16.msra.mxu0 0
      %419 = vmatprep.subr.bf16.mxu0 0
      %420 = vmatpush1.bf16.msra.mxu0 0
      %421 = vmatprep.subr.bf16.mxu0 0
      %422 = vmatpush1.bf16.msra.mxu0 0
      %423 = vmatprep.subr.bf16.mxu0 0
      %424 = vmatpush1.bf16.msra.mxu0 0
      %425 = vmatprep.mubr.bf16.mxu0 0
      %426 = vmatmul.mubr.bf16.gmra.mrb[0].mxu0 %v387
      %v427 = vpop.f32.mrb[0].mxu0
      %v428 = vadd.f32 0.0, %v427
      %v429 = vpop.f32.mrb[0].mxu0
      %v430 = vpop.f32.mrb[0].mxu0
      %v431 = vpop.f32.mrb[0].mxu0
      %432 = vdwg.mxu0
      %v433 = vrcp.pop %v384
      %v434 = vmul.f32 %v428, %v433
      %v436 = vunpack.c.l.b16 %v318
      %v437 = vpack.c.b16 %v436, %v436
      %438 = vrot.lane.b32.xlu0 %v437, 96
      %v439 = vpop.permute.xlu0 %438
      %v441 = vunpack.c.l.b16 %v319
      %v442 = vpack.c.b16 %v441, %v441
      %443 = vrot.lane.b32.xlu0 %v442, 96
      %v444 = vpop.permute.xlu0 %443
      %v446 = vsel %vm328, %v439, 0
      %v449 = vsel %vm328, %v444, 0
      %451 = vmatprep.subr.bf16.mxu0 0
      %452 = vmatpush1.bf16.xpose.msra.mxu0 %v449
      %453 = vmatprep.subr.bf16.mxu0 0
      %454 = vmatpush1.bf16.xpose.msra.mxu0 0
      %455 = vmatprep.subr.bf16.mxu0 0
      %456 = vmatpush1.bf16.xpose.msra.mxu0 0
      %457 = vmatprep.subr.bf16.mxu0 0
      %458 = vmatpush1.bf16.xpose.msra.mxu0 0
      %459 = vmatprep.subr.bf16.mxu0 0
      %460 = vmatpush1.bf16.xpose.msra.mxu0 0
      %461 = vmatprep.subr.bf16.mxu0 0
      %462 = vmatpush1.bf16.xpose.msra.mxu0 0
      %463 = vmatprep.subr.bf16.mxu0 0
      %464 = vmatpush1.bf16.xpose.msra.mxu0 0
      %465 = vmatprep.subr.bf16.mxu0 0
      %466 = vmatpush1.bf16.xpose.msra.mxu0 0
      %467 = vmatprep.subr.bf16.mxu0 0
      %468 = vmatpush1.bf16.xpose.msra.mxu0 0
      %469 = vmatprep.subr.bf16.mxu0 0
      %470 = vmatpush1.bf16.xpose.msra.mxu0 0
      %471 = vmatprep.subr.bf16.mxu0 0
      %472 = vmatpush1.bf16.xpose.msra.mxu0 0
      %473 = vmatprep.subr.bf16.mxu0 0
      %474 = vmatpush1.bf16.xpose.msra.mxu0 0
      %475 = vmatprep.subr.bf16.mxu0 0
      %476 = vmatpush1.bf16.xpose.msra.mxu0 0
      %477 = vmatprep.subr.bf16.mxu0 0
      %478 = vmatpush1.bf16.xpose.msra.mxu0 0
      %479 = vmatprep.subr.bf16.mxu0 0
      %480 = vmatpush1.bf16.xpose.msra.mxu0 0
      %481 = vmatprep.subr.bf16.mxu0 0
      %482 = vmatpush1.bf16.xpose.msra.mxu0 0
      %483 = vmatprep.mubr.bf16.mxu0 0
      %484 = vmatmul.mubr.bf16.gmra.mrb[0].mxu0 %v446
      %v485 = vpop.f32.mrb[0].mxu0
      %v486 = vadd.f32 %v326, %v485
      %v487 = vpop.f32.mrb[0].mxu0
      %v488 = vpop.f32.mrb[0].mxu0
      %v489 = vpop.f32.mrb[0].mxu0
      %490 = vdwg.mxu0
      %v491 = vsel %vm375, %v486, -inf
      %492 = vmax.xlane.f32.xlu0 %v491
      %v493 = vpop.xlane.xlu0 %492
      %v494 = vsub.f32 %v486, %v493
      %v495 = vmul.f32 %v494, 1.442695
      %v496 = vpow.pop %v495
      %v497 = vsel %vm375, %v496, 0.0
      %498 = vadd.xlane.f32.xlu0 %v497
      %v499 = vpop.xlane.xlu0 %498
      %v500 = vpack.c.bf16 %v496, %v496
      %v502 = vunpack.c.l.b16 %v320
      %v503 = vpack.c.b16 %v502, %v502
      %504 = vrot.lane.b32.xlu0 %v503, 96
      %v505 = vpop.permute.xlu0 %504
      %v507 = vsel %vm375, %v500, 0
      %v510 = vsel %vm389, %v505, 0
      %512 = vmatprep.subr.bf16.mxu0 0
      %513 = vmatpush1.bf16.msra.mxu0 %v510
      %514 = vmatprep.subr.bf16.mxu0 0
      %515 = vmatpush1.bf16.msra.mxu0 0
      %516 = vmatprep.subr.bf16.mxu0 0
      %517 = vmatpush1.bf16.msra.mxu0 0
      %518 = vmatprep.subr.bf16.mxu0 0
      %519 = vmatpush1.bf16.msra.mxu0 0
      %520 = vmatprep.subr.bf16.mxu0 0
      %521 = vmatpush1.bf16.msra.mxu0 0
      %522 = vmatprep.subr.bf16.mxu0 0
      %523 = vmatpush1.bf16.msra.mxu0 0
      %524 = vmatprep.subr.bf16.mxu0 0
      %525 = vmatpush1.bf16.msra.mxu0 0
      %526 = vmatprep.subr.bf16.mxu0 0
      %527 = vmatpush1.bf16.msra.mxu0 0
      %528 = vmatprep.subr.bf16.mxu0 0
      %529 = vmatpush1.bf16.msra.mxu0 0
      %530 = vmatprep.subr.bf16.mxu0 0
      %531 = vmatpush1.bf16.msra.mxu0 0
      %532 = vmatprep.subr.bf16.mxu0 0
      %533 = vmatpush1.bf16.msra.mxu0 0
      %534 = vmatprep.subr.bf16.mxu0 0
      %535 = vmatpush1.bf16.msra.mxu0 0
      %536 = vmatprep.subr.bf16.mxu0 0
      %537 = vmatpush1.bf16.msra.mxu0 0
      %538 = vmatprep.subr.bf16.mxu0 0
      %539 = vmatpush1.bf16.msra.mxu0 0
      %540 = vmatprep.subr.bf16.mxu0 0
      %541 = vmatpush1.bf16.msra.mxu0 0
      %542 = vmatprep.subr.bf16.mxu0 0
      %543 = vmatpush1.bf16.msra.mxu0 0
      %544 = vmatprep.mubr.bf16.mxu0 0
      %545 = vmatmul.mubr.bf16.gmra.mrb[0].mxu0 %v507
      %v546 = vpop.f32.mrb[0].mxu0
      %v547 = vadd.f32 0.0, %v546
      %v548 = vpop.f32.mrb[0].mxu0
      %v549 = vpop.f32.mrb[0].mxu0
      %v550 = vpop.f32.mrb[0].mxu0
      %551 = vdwg.mxu0
      %v552 = vrcp.pop %v499
      %v553 = vmul.f32 %v547, %v552
      %554 = vrot.lane.b32.xlu0 %v437, 64
      %v555 = vpop.permute.xlu0 %554
      %556 = vrot.lane.b32.xlu0 %v442, 64
      %v557 = vpop.permute.xlu0 %556
      %v559 = vsel %vm328, %v555, 0
      %v562 = vsel %vm328, %v557, 0
      %564 = vmatprep.subr.bf16.mxu0 0
      %565 = vmatpush1.bf16.xpose.msra.mxu0 %v562
      %566 = vmatprep.subr.bf16.mxu0 0
      %567 = vmatpush1.bf16.xpose.msra.mxu0 0
      %568 = vmatprep.subr.bf16.mxu0 0
      %569 = vmatpush1.bf16.xpose.msra.mxu0 0
      %570 = vmatprep.subr.bf16.mxu0 0
      %571 = vmatpush1.bf16.xpose.msra.mxu0 0
      %572 = vmatprep.subr.bf16.mxu0 0
      %573 = vmatpush1.bf16.xpose.msra.mxu0 0
      %574 = vmatprep.subr.bf16.mxu0 0
      %575 = vmatpush1.bf16.xpose.msra.mxu0 0
      %576 = vmatprep.subr.bf16.mxu0 0
      %577 = vmatpush1.bf16.xpose.msra.mxu0 0
      %578 = vmatprep.subr.bf16.mxu0 0
      %579 = vmatpush1.bf16.xpose.msra.mxu0 0
      %580 = vmatprep.subr.bf16.mxu0 0
      %581 = vmatpush1.bf16.xpose.msra.mxu0 0
      %582 = vmatprep.subr.bf16.mxu0 0
      %583 = vmatpush1.bf16.xpose.msra.mxu0 0
      %584 = vmatprep.subr.bf16.mxu0 0
      %585 = vmatpush1.bf16.xpose.msra.mxu0 0
      %586 = vmatprep.subr.bf16.mxu0 0
      %587 = vmatpush1.bf16.xpose.msra.mxu0 0
      %588 = vmatprep.subr.bf16.mxu0 0
      %589 = vmatpush1.bf16.xpose.msra.mxu0 0
      %590 = vmatprep.subr.bf16.mxu0 0
      %591 = vmatpush1.bf16.xpose.msra.mxu0 0
      %592 = vmatprep.subr.bf16.mxu0 0
      %593 = vmatpush1.bf16.xpose.msra.mxu0 0
      %594 = vmatprep.subr.bf16.mxu0 0
      %595 = vmatpush1.bf16.xpose.msra.mxu0 0
      %596 = vmatprep.mubr.bf16.mxu0 0
      %597 = vmatmul.mubr.bf16.gmra.mrb[0].mxu0 %v559
      %v598 = vpop.f32.mrb[0].mxu0
      %v599 = vadd.f32 %v326, %v598
      %v600 = vpop.f32.mrb[0].mxu0
      %v601 = vpop.f32.mrb[0].mxu0
      %v602 = vpop.f32.mrb[0].mxu0
      %603 = vdwg.mxu0
      %v604 = vsel %vm375, %v599, -inf
      %605 = vmax.xlane.f32.xlu0 %v604
      %v606 = vpop.xlane.xlu0 %605
      %v607 = vsub.f32 %v599, %v606
      %v608 = vmul.f32 %v607, 1.442695
      %v609 = vpow.pop %v608
      %v610 = vsel %vm375, %v609, 0.0
      %611 = vadd.xlane.f32.xlu0 %v610
      %v612 = vpop.xlane.xlu0 %611
      %v613 = vpack.c.bf16 %v609, %v609
      %614 = vrot.lane.b32.xlu0 %v503, 64
      %v615 = vpop.permute.xlu0 %614
      %v617 = vsel %vm375, %v613, 0
      %v620 = vsel %vm389, %v615, 0
      %622 = vmatprep.subr.bf16.mxu0 0
      %623 = vmatpush1.bf16.msra.mxu0 %v620
      %624 = vmatprep.subr.bf16.mxu0 0
      %625 = vmatpush1.bf16.msra.mxu0 0
      %626 = vmatprep.subr.bf16.mxu0 0
      %627 = vmatpush1.bf16.msra.mxu0 0
      %628 = vmatprep.subr.bf16.mxu0 0
      %629 = vmatpush1.bf16.msra.mxu0 0
      %630 = vmatprep.subr.bf16.mxu0 0
      %631 = vmatpush1.bf16.msra.mxu0 0
      %632 = vmatprep.subr.bf16.mxu0 0
      %633 = vmatpush1.bf16.msra.mxu0 0
      %634 = vmatprep.subr.bf16.mxu0 0
      %635 = vmatpush1.bf16.msra.mxu0 0
      %636 = vmatprep.subr.bf16.mxu0 0
      %637 = vmatpush1.bf16.msra.mxu0 0
      %638 = vmatprep.subr.bf16.mxu0 0
      %639 = vmatpush1.bf16.msra.mxu0 0
      %640 = vmatprep.subr.bf16.mxu0 0
      %641 = vmatpush1.bf16.msra.mxu0 0
      %642 = vmatprep.subr.bf16.mxu0 0
      %643 = vmatpush1.bf16.msra.mxu0 0
      %644 = vmatprep.subr.bf16.mxu0 0
      %645 = vmatpush1.bf16.msra.mxu0 0
      %646 = vmatprep.subr.bf16.mxu0 0
      %647 = vmatpush1.bf16.msra.mxu0 0
      %648 = vmatprep.subr.bf16.mxu0 0
      %649 = vmatpush1.bf16.msra.mxu0 0
      %650 = vmatprep.subr.bf16.mxu0 0
      %651 = vmatpush1.bf16.msra.mxu0 0
      %652 = vmatprep.subr.bf16.mxu0 0
      %653 = vmatpush1.bf16.msra.mxu0 0
      %654 = vmatprep.mubr.bf16.mxu0 0
      %655 = vmatmul.mubr.bf16.gmra.mrb[0].mxu0 %v617
      %v656 = vpop.f32.mrb[0].mxu0
      %v657 = vadd.f32 0.0, %v656
      %v658 = vpop.f32.mrb[0].mxu0
      %v659 = vpop.f32.mrb[0].mxu0
      %v660 = vpop.f32.mrb[0].mxu0
      %661 = vdwg.mxu0
      %v662 = vrcp.pop %v612
      %v663 = vmul.f32 %v657, %v662
      %664 = vrot.lane.b32.xlu0 %v437, 32
      %v665 = vpop.permute.xlu0 %664
      %666 = vrot.lane.b32.xlu0 %v442, 32
      %v667 = vpop.permute.xlu0 %666
      %v669 = vsel %vm328, %v665, 0
      %v672 = vsel %vm328, %v667, 0
      %674 = vmatprep.subr.bf16.mxu0 0
      %675 = vmatpush1.bf16.xpose.msra.mxu0 %v672
      %676 = vmatprep.subr.bf16.mxu0 0
      %677 = vmatpush1.bf16.xpose.msra.mxu0 0
      %678 = vmatprep.subr.bf16.mxu0 0
      %679 = vmatpush1.bf16.xpose.msra.mxu0 0
      %680 = vmatprep.subr.bf16.mxu0 0
      %681 = vmatpush1.bf16.xpose.msra.mxu0 0
      %682 = vmatprep.subr.bf16.mxu0 0
      %683 = vmatpush1.bf16.xpose.msra.mxu0 0
      %684 = vmatprep.subr.bf16.mxu0 0
      %685 = vmatpush1.bf16.xpose.msra.mxu0 0
      %686 = vmatprep.subr.bf16.mxu0 0
      %687 = vmatpush1.bf16.xpose.msra.mxu0 0
      %688 = vmatprep.subr.bf16.mxu0 0
      %689 = vmatpush1.bf16.xpose.msra.mxu0 0
      %690 = vmatprep.subr.bf16.mxu0 0
      %691 = vmatpush1.bf16.xpose.msra.mxu0 0
      %692 = vmatprep.subr.bf16.mxu0 0
      %693 = vmatpush1.bf16.xpose.msra.mxu0 0
      %694 = vmatprep.subr.bf16.mxu0 0
      %695 = vmatpush1.bf16.xpose.msra.mxu0 0
      %696 = vmatprep.subr.bf16.mxu0 0
      %697 = vmatpush1.bf16.xpose.msra.mxu0 0
      %698 = vmatprep.subr.bf16.mxu0 0
      %699 = vmatpush1.bf16.xpose.msra.mxu0 0
      %700 = vmatprep.subr.bf16.mxu0 0
      %701 = vmatpush1.bf16.xpose.msra.mxu0 0
      %702 = vmatprep.subr.bf16.mxu0 0
      %703 = vmatpush1.bf16.xpose.msra.mxu0 0
      %704 = vmatprep.subr.bf16.mxu0 0
      %705 = vmatpush1.bf16.xpose.msra.mxu0 0
      %706 = vmatprep.mubr.bf16.mxu0 0
      %707 = vmatmul.mubr.bf16.gmra.mrb[0].mxu0 %v669
      %v708 = vpop.f32.mrb[0].mxu0
      %v709 = vadd.f32 %v326, %v708
      %v710 = vpop.f32.mrb[0].mxu0
      %v711 = vpop.f32.mrb[0].mxu0
      %v712 = vpop.f32.mrb[0].mxu0
      %713 = vdwg.mxu0
      %v714 = vsel %vm375, %v709, -inf
      %715 = vmax.xlane.f32.xlu0 %v714
      %v716 = vpop.xlane.xlu0 %715
      %v717 = vsub.f32 %v709, %v716
      %v718 = vmul.f32 %v717, 1.442695
      %v719 = vpow.pop %v718
      %v720 = vsel %vm375, %v719, 0.0
      %721 = vadd.xlane.f32.xlu0 %v720
      %v722 = vpop.xlane.xlu0 %721
      %v723 = vpack.c.bf16 %v719, %v719
      %724 = vrot.lane.b32.xlu0 %v503, 32
      %v725 = vpop.permute.xlu0 %724
      %v727 = vsel %vm375, %v723, 0
      %v730 = vsel %vm389, %v725, 0
      %732 = vmatprep.subr.bf16.mxu0 0
      %733 = vmatpush1.bf16.msra.mxu0 %v730
      %734 = vmatprep.subr.bf16.mxu0 0
      %735 = vmatpush1.bf16.msra.mxu0 0
      %736 = vmatprep.subr.bf16.mxu0 0
      %737 = vmatpush1.bf16.msra.mxu0 0
      %738 = vmatprep.subr.bf16.mxu0 0
      %739 = vmatpush1.bf16.msra.mxu0 0
      %740 = vmatprep.subr.bf16.mxu0 0
      %741 = vmatpush1.bf16.msra.mxu0 0
      %742 = vmatprep.subr.bf16.mxu0 0
      %743 = vmatpush1.bf16.msra.mxu0 0
      %744 = vmatprep.subr.bf16.mxu0 0
      %745 = vmatpush1.bf16.msra.mxu0 0
      %746 = vmatprep.subr.bf16.mxu0 0
      %747 = vmatpush1.bf16.msra.mxu0 0
      %748 = vmatprep.subr.bf16.mxu0 0
      %749 = vmatpush1.bf16.msra.mxu0 0
      %750 = vmatprep.subr.bf16.mxu0 0
      %751 = vmatpush1.bf16.msra.mxu0 0
      %752 = vmatprep.subr.bf16.mxu0 0
      %753 = vmatpush1.bf16.msra.mxu0 0
      %754 = vmatprep.subr.bf16.mxu0 0
      %755 = vmatpush1.bf16.msra.mxu0 0
      %756 = vmatprep.subr.bf16.mxu0 0
      %757 = vmatpush1.bf16.msra.mxu0 0
      %758 = vmatprep.subr.bf16.mxu0 0
      %759 = vmatpush1.bf16.msra.mxu0 0
      %760 = vmatprep.subr.bf16.mxu0 0
      %761 = vmatpush1.bf16.msra.mxu0 0
      %762 = vmatprep.subr.bf16.mxu0 0
      %763 = vmatpush1.bf16.msra.mxu0 0
      %764 = vmatprep.mubr.bf16.mxu0 0
      %765 = vmatmul.mubr.bf16.gmra.mrb[0].mxu0 %v727
      %v766 = vpop.f32.mrb[0].mxu0
      %v767 = vadd.f32 0.0, %v766
      %v768 = vpop.f32.mrb[0].mxu0
      %v769 = vpop.f32.mrb[0].mxu0
      %v770 = vpop.f32.mrb[0].mxu0
      %771 = vdwg.mxu0
      %v772 = vrcp.pop %v722
      %v773 = vmul.f32 %v767, %v772
      %775 = vrot.lane.b32.xlu0 %v553, 32
      %v776 = vpop.permute.xlu0 %775
      %779 = vrot.lane.b32.xlu0 %v663, 64
      %v780 = vpop.permute.xlu0 %779
      %783 = vrot.lane.b32.xlu0 %v773, 96
      %v784 = vpop.permute.xlu0 %783
      %v786 = vsel %vm328, %v434, %v776
      %vm787 = vcmask 523264
      %v788 = vsel %vm787, %v786, %v780
      %vm789 = vcmask 785408
      %v790 = vsel %vm789, %v788, %v784
      %v791 = vpack.c.bf16 %v790, %v790
      %792 = vst [vmem:[%s316] sm:$0xf] %v791
      %p793 = scmp.lt.s32.totalorder %s19, 1
      %s794 = scalar_select %p793, %s19, 1
      %p795 = scmp.lt.s32.totalorder %s20, 0
      %s796 = scalar_select %p795, %s20, 0
      %s797 = sadd.s32 %s796, %s794
      %s798 = smul.addr %s797, 4
      %s799 = scalar_lea.vmem %s4, %s798
      // Predicated region
      $region37: #{_lambda_.14} parent=35 // pred_check
        %p800 = pneg %p161
      $region38: #{_lambda_.14} parent=35 // pred_check_branch
        %802 = sbr.rel (%p800) target = $region40
      $region39: #{_lambda_.14} parent=35 // pred_region
        _
      $region40: #{_lambda_.14} parent=35 // pred_fallthru
        _
    $region36: #{_lambda_.14} parent=5 // pred_fallthru
      _
    %p803 = scmp.le.s32.totalorder 2, %s10
    // Predicated region
    $region41: #{_lambda_.14} parent=5 // pred_check
      %p804 = pneg %p803
    $region42: #{_lambda_.14} parent=5 // pred_check_branch
      %806 = sbr.rel (%p804) target = $region44
    $region43: #{_lambda_.14} parent=5 // pred_region
      %s807 = ssub.s32 %s10, 2
      // Predicated region
      $region45: #{_lambda_.14} parent=43 // pred_check
        %p808 = pneg %p167
      $region46: #{_lambda_.14} parent=43 // pred_check_branch
        %810 = sbr.rel (%p808) target = $region48
      $region47: #{_lambda_.14} parent=43 // pred_region
        %p811 = scmp.lt.s32.totalorder %s21, 1
        %s812 = scalar_select %p811, %s21, 1
        %p813 = scmp.lt.s32.totalorder %s22, 0
        %s814 = scalar_select %p813, %s22, 0
        %s815 = sadd.s32 %s814, %s812
        %s816 = smul.addr %s815, 4
        %s817 = scalar_lea.vmem %s4, %s816
      $region48: #{_lambda_.14} parent=43 // pred_fallthru
        _
    $region44: #{_lambda_.14} parent=5 // pred_fallthru
      _
  $region6: #{_lambda_.14} parent=0 // loop_footer
    %s14 = sadd.s32 1, %s10
  $region7: #{_lambda_.14} parent=0 // loop_footer_branch
    %9 = sbr.rel target = $region3
  $region8: #{_lambda_.14} parent=0 // loop_exit
    _

// kernel: _lambda_.17
$region0: #{_lambda_.17}
  #allocation0 [shape = 'u32[]', space=smem, size = 0x4, offset = 0x4, fixed_abs, tag = 'smem constant byte address 0x4 - core index']
  #allocation1 [shape = 'u32[144,128]{1,0:T(1,128)}', space=vmem, size = 0x12000, scoped, tag = 'internal scratch']
  %s0 = inlined_call_operand.vmem [shape: bf16[16,256], index: 0, kind: input, shape index: {}]
  %s1 = inlined_call_operand.vmem [shape: bf16[256,128], index: 1, kind: input, shape index: {}]
  %s2 = inlined_call_operand.vmem [shape: f32[1,128], index: 2, kind: input, shape index: {}, may-alias: {2,5}]
  %s3 = inlined_call_operand.vmem [shape: bf16[16,128], index: 3, kind: input, shape index: {}]
  %s4 = inlined_call_operand.vmem [shape: f32[1,128], index: 4, kind: input, shape index: {}]
  %s5 = inlined_call_operand.vmem [shape: f32[1,128], index: 5, kind: input, shape index: {}, may-alias: {2,5}]
  %s6 = inlined_call_operand.vmem [shape: bf16[16,128], index: 6, kind: output, shape index: {}]
  %s7 = sld [smem:[#allocation0]]
  $region34: #{_lambda_.17} parent=0
    _
  %s9 = ssub.s32 1, %s7
  %s10 = scalar_select 0, %s9, %s7
  // Predicated region
  $region2: #{_lambda_.17} parent=0 // pred_check
    _
  $region3: #{_lambda_.17} parent=0 // pred_check_branch
    %12 = sbr.rel (0) target = $region5
  $region4: #{_lambda_.17} parent=0 // pred_region
    _
  $region5: #{_lambda_.17} parent=0 // pred_fallthru
    _
  // Predicated region
  $region6: #{_lambda_.17} parent=0 // pred_check
    _
  $region7: #{_lambda_.17} parent=0 // pred_check_branch
    %14 = sbr.rel (0) target = $region9
  $region8: #{_lambda_.17} parent=0 // pred_region
    _
  $region9: #{_lambda_.17} parent=0 // pred_fallthru
    _
  // Predicated region
  $region10: #{_lambda_.17} parent=0 // pred_check
    _
  $region11: #{_lambda_.17} parent=0 // pred_check_branch
    %16 = sbr.rel (0) target = $region13
  $region12: #{_lambda_.17} parent=0 // pred_region
    _
  $region13: #{_lambda_.17} parent=0 // pred_fallthru
    _
  // Predicated region
  $region14: #{_lambda_.17} parent=0 // pred_check
    _
  $region15: #{_lambda_.17} parent=0 // pred_check_branch
    %18 = sbr.rel (0) target = $region17
  $region16: #{_lambda_.17} parent=0 // pred_region
    _
  $region17: #{_lambda_.17} parent=0 // pred_fallthru
    _
  // Predicated region
  $region18: #{_lambda_.17} parent=0 // pred_check
    _
  $region19: #{_lambda_.17} parent=0 // pred_check_branch
    %20 = sbr.rel (0) target = $region21
  $region20: #{_lambda_.17} parent=0 // pred_region
    _
  $region21: #{_lambda_.17} parent=0 // pred_fallthru
    _
  // Predicated region
  $region22: #{_lambda_.17} parent=0 // pred_check
    _
  $region23: #{_lambda_.17} parent=0 // pred_check_branch
    %22 = sbr.rel (0) target = $region25
  $region24: #{_lambda_.17} parent=0 // pred_region
    _
  $region25: #{_lambda_.17} parent=0 // pred_fallthru
    _
  %v24 = vld [vmem:[%s0] sm:$0xff]
  %v25 = vld [vmem:[%s0 + $0x8] sm:$0xff]
  %v26 = vld [vmem:[%s1] sm:$0xf]
  %v27 = vld [vmem:[%s1 + $0x4] sm:$0xf]
  %v28 = vld [vmem:[%s1 + $0x8] sm:$0xf]
  %v29 = vld [vmem:[%s1 + $0xc] sm:$0xf]
  %v30 = vld [vmem:[%s1 + $0x10] sm:$0xf]
  %v31 = vld [vmem:[%s1 + $0x14] sm:$0xf]
  %v32 = vld [vmem:[%s1 + $0x18] sm:$0xf]
  %v33 = vld [vmem:[%s1 + $0x1c] sm:$0xf]
  %v34 = vld [vmem:[%s1 + $0x20] sm:$0xf]
  %v35 = vld [vmem:[%s1 + $0x24] sm:$0xf]
  %v36 = vld [vmem:[%s1 + $0x28] sm:$0xf]
  %v37 = vld [vmem:[%s1 + $0x2c] sm:$0xf]
  %v38 = vld [vmem:[%s1 + $0x30] sm:$0xf]
  %v39 = vld [vmem:[%s1 + $0x34] sm:$0xf]
  %v40 = vld [vmem:[%s1 + $0x38] sm:$0xf]
  %v41 = vld [vmem:[%s1 + $0x3c] sm:$0xf]
  %v42 = vld [vmem:[%s1 + $0x40] sm:$0xf]
  %v43 = vld [vmem:[%s1 + $0x44] sm:$0xf]
  %v44 = vld [vmem:[%s1 + $0x48] sm:$0xf]
  %v45 = vld [vmem:[%s1 + $0x4c] sm:$0xf]
  %v46 = vld [vmem:[%s1 + $0x50] sm:$0xf]
  %v47 = vld [vmem:[%s1 + $0x54] sm:$0xf]
  %v48 = vld [vmem:[%s1 + $0x58] sm:$0xf]
  %v49 = vld [vmem:[%s1 + $0x5c] sm:$0xf]
  %v50 = vld [vmem:[%s1 + $0x60] sm:$0xf]
  %v51 = vld [vmem:[%s1 + $0x64] sm:$0xf]
  %v52 = vld [vmem:[%s1 + $0x68] sm:$0xf]
  %v53 = vld [vmem:[%s1 + $0x6c] sm:$0xf]
  %v54 = vld [vmem:[%s1 + $0x70] sm:$0xf]
  %v55 = vld [vmem:[%s1 + $0x74] sm:$0xf]
  %v56 = vld [vmem:[%s1 + $0x78] sm:$0xf]
  %v57 = vld [vmem:[%s1 + $0x7c] sm:$0xf]
  %v58 = vld [vmem:[%s2] sm:$0x1]
  %v60 = vlaneseq
  %v61 = vshrl.u32 %v60, 7
  %v62 = vsub.s32 0, %v61
  %v63 = vrot.slane %v58, %v62
  %v67 = vunpack.c.l.b16 %v24
  %v68 = vunpack.c.h.b16 %v24
  %v69 = vunpack.c.l.b16 %v25
  %v70 = vunpack.c.h.b16 %v25
  %v71 = vpack.c.b16 %v69, %v67
  %v72 = vpack.c.b16 %v70, %v68
  %v107 = vunpack.c.l.b16 %v26
  %v108 = vunpack.c.l.b16 %v27
  %v109 = vunpack.c.l.b16 %v28
  %v110 = vunpack.c.l.b16 %v29
  %v111 = vunpack.c.l.b16 %v30
  %v112 = vunpack.c.l.b16 %v31
  %v113 = vunpack.c.l.b16 %v32
  %v114 = vunpack.c.l.b16 %v33
  %v115 = vunpack.c.l.b16 %v34
  %v116 = vunpack.c.l.b16 %v35
  %v117 = vunpack.c.l.b16 %v36
  %v118 = vunpack.c.l.b16 %v37
  %v119 = vunpack.c.l.b16 %v38
  %v120 = vunpack.c.l.b16 %v39
  %v121 = vunpack.c.l.b16 %v40
  %v122 = vunpack.c.l.b16 %v41
  %v123 = vunpack.c.l.b16 %v42
  %v124 = vunpack.c.l.b16 %v43
  %v125 = vunpack.c.l.b16 %v44
  %v126 = vunpack.c.l.b16 %v45
  %v127 = vunpack.c.l.b16 %v46
  %v128 = vunpack.c.l.b16 %v47
  %v129 = vunpack.c.l.b16 %v48
  %v130 = vunpack.c.l.b16 %v49
  %v131 = vunpack.c.l.b16 %v50
  %v132 = vunpack.c.l.b16 %v51
  %v133 = vunpack.c.l.b16 %v52
  %v134 = vunpack.c.l.b16 %v53
  %v135 = vunpack.c.l.b16 %v54
  %v136 = vunpack.c.l.b16 %v55
  %v137 = vunpack.c.l.b16 %v56
  %v138 = vunpack.c.l.b16 %v57
  %v139 = vpack.c.b16 %v108, %v107
  %v140 = vpack.c.b16 %v110, %v109
  %v141 = vpack.c.b16 %v112, %v111
  %v142 = vpack.c.b16 %v114, %v113
  %v143 = vpack.c.b16 %v116, %v115
  %v144 = vpack.c.b16 %v118, %v117
  %v145 = vpack.c.b16 %v120, %v119
  %v146 = vpack.c.b16 %v122, %v121
  %v147 = vpack.c.b16 %v124, %v123
  %v148 = vpack.c.b16 %v126, %v125
  %v149 = vpack.c.b16 %v128, %v127
  %v150 = vpack.c.b16 %v130, %v129
  %v151 = vpack.c.b16 %v132, %v131
  %v152 = vpack.c.b16 %v134, %v133
  %v153 = vpack.c.b16 %v136, %v135
  %v154 = vpack.c.b16 %v138, %v137
  %171 = vmatprep.subr.bf16.mxu0 0
  %172 = vmatpush1.bf16.msra.mxu0 %v139
  %173 = vmatprep.subr.bf16.mxu0 0
  %174 = vmatpush1.bf16.msra.mxu0 %v140
  %175 = vmatprep.subr.bf16.mxu0 0
  %176 = vmatpush1.bf16.msra.mxu0 %v141
  %177 = vmatprep.subr.bf16.mxu0 0
  %178 = vmatpush1.bf16.msra.mxu0 %v142
  %179 = vmatprep.subr.bf16.mxu0 0
  %180 = vmatpush1.bf16.msra.mxu0 %v143
  %181 = vmatprep.subr.bf16.mxu0 0
  %182 = vmatpush1.bf16.msra.mxu0 %v144
  %183 = vmatprep.subr.bf16.mxu0 0
  %184 = vmatpush1.bf16.msra.mxu0 %v145
  %185 = vmatprep.subr.bf16.mxu0 0
  %186 = vmatpush1.bf16.msra.mxu0 %v146
  %187 = vmatprep.subr.bf16.mxu0 0
  %188 = vmatpush1.bf16.msra.mxu0 %v147
  %189 = vmatprep.subr.bf16.mxu0 0
  %190 = vmatpush1.bf16.msra.mxu0 %v148
  %191 = vmatprep.subr.bf16.mxu0 0
  %192 = vmatpush1.bf16.msra.mxu0 %v149
  %193 = vmatprep.subr.bf16.mxu0 0
  %194 = vmatpush1.bf16.msra.mxu0 %v150
  %195 = vmatprep.subr.bf16.mxu0 0
  %196 = vmatpush1.bf16.msra.mxu0 %v151
  %197 = vmatprep.subr.bf16.mxu0 0
  %198 = vmatpush1.bf16.msra.mxu0 %v152
  %199 = vmatprep.subr.bf16.mxu0 0
  %200 = vmatpush1.bf16.msra.mxu0 %v153
  %201 = vmatprep.subr.bf16.mxu0 0
  %202 = vmatpush1.bf16.msra.mxu0 %v154
  %203 = vmatprep.mubr.bf16.mxu0 %v72
  %204 = vmatmul.mubr.bf16.gmra.mrb[0].mxu0 %v71
  %v205 = vpop.f32.mrb[0].mxu0
  %v206 = vadd.f32 %v63, %v205
  %v207 = vpop.f32.mrb[0].mxu0
  %v208 = vpop.f32.mrb[0].mxu0
  %v209 = vadd.f32 %v63, %v208
  %v210 = vpop.f32.mrb[0].mxu0
  %211 = vdwg.mxu0
  %v212 = vld [vmem:[%s3] sm:$0xf]
  %v213 = vld [vmem:[%s3 + $0x4] sm:$0xf]
  %v214 = vunpack.c.l.bf16 %v212
  %v215 = vunpack.c.l.bf16 %v213
  %v216 = vadd.f32 %v206, %v214
  %v217 = vadd.f32 %v209, %v215
  %218 = vadd.xlane.f32.xlu0 %v216
  %v219 = vpop.xlane.xlu0 %218
  %220 = vadd.xlane.f32.xlu0 %v217
  %v221 = vpop.xlane.xlu0 %220
  %v222 = vrcp.pop 128.0
  %v223 = vmul.f32 %v219, %v222
  %v224 = vmul.f32 %v221, %v222
  %v225 = vsub.f32 %v216, %v223
  %v226 = vsub.f32 %v217, %v224
  %v227 = vmul.f32 %v225, %v225
  %v228 = vmul.f32 %v226, %v226
  %229 = vadd.xlane.f32.xlu0 %v227
  %v230 = vpop.xlane.xlu0 %229
  %231 = vadd.xlane.f32.xlu0 %v228
  %v232 = vpop.xlane.xlu0 %231
  %v233 = vmul.f32 %v230, %v222
  %v234 = vmul.f32 %v232, %v222
  %v235 = vadd.f32 %v233, 1e-12
  %v236 = vadd.f32 %v234, 1e-12
  %v237 = vrsqrt.pop %v235
  %v238 = vrsqrt.pop %v236
  %v239 = vmul.f32 %v225, %v237
  %v240 = vmul.f32 %v226, %v238
  %v241 = vld [vmem:[%s4] sm:$0x1]
  %v243 = vlaneseq
  %v244 = vshrl.u32 %v243, 7
  %v245 = vsub.s32 0, %v244
  %v246 = vrot.slane %v241, %v245
  %v248 = vmul.f32 %v239, %v246
  %v249 = vmul.f32 %v240, %v246
  %v250 = vld [vmem:[%s5] sm:$0x1]
  %v252 = vlaneseq
  %v253 = vshrl.u32 %v252, 7
  %v254 = vsub.s32 0, %v253
  %v255 = vrot.slane %v250, %v254
  %v257 = vadd.f32 %v248, %v255
  %v258 = vadd.f32 %v249, %v255
  %v259 = vpack.c.bf16 %v258, %v257
  %v261 = vunpack.c.l.b16 %v259
  %v262 = vunpack.c.h.b16 %v259
  %v263 = vpack.c.b16 %v261, %v261
  %v264 = vpack.c.b16 %v262, %v262
  %267 = vst [vmem:[%s6] sm:$0xf] %v263
  %268 = vst [vmem:[%s6 + $0x4] sm:$0xf] %v264
  // Predicated region
  $region26: #{_lambda_.17} parent=0 // pred_check
    _
  $region27: #{_lambda_.17} parent=0 // pred_check_branch
    %270 = sbr.rel (0) target = $region29
  $region28: #{_lambda_.17} parent=0 // pred_region
    _
  $region29: #{_lambda_.17} parent=0 // pred_fallthru
    _
  // Predicated region
  $region30: #{_lambda_.17} parent=0 // pred_check
    _
  $region31: #{_lambda_.17} parent=0 // pred_check_branch
    %272 = sbr.rel (0) target = $region33
  $region32: #{_lambda_.17} parent=0 // pred_region
    _
  $region33: #{_lambda_.17} parent=0 // pred_fallthru
    _

// kernel: _lambda_.23
$region0: #{_lambda_.23}
  #allocation0 [shape = 'u32[]', space=smem, size = 0x4, offset = 0x4, fixed_abs, tag = 'smem constant byte address 0x4 - core index']
  #allocation1 [shape = 'u32[144,128]{1,0:T(1,128)}', space=vmem, size = 0x12000, scoped, tag = 'internal scratch']
  %s0 = inlined_call_operand.vmem [shape: bf16[2,128], index: 0, kind: input, shape index: {}]
  %s1 = inlined_call_operand.vmem [shape: bf16[128,128], index: 1, kind: input, shape index: {}]
  %s2 = inlined_call_operand.vmem [shape: f32[1,128], index: 2, kind: input, shape index: {}]
  %s3 = inlined_call_operand.vmem [shape: f32[2,128], index: 3, kind: output, shape index: {}]
  %s4 = sld [smem:[#allocation0]]
  $region22: #{_lambda_.23} parent=0
    _
  %s6 = ssub.s32 1, %s4
  %s7 = scalar_select 0, %s6, %s4
  // Predicated region
  $region2: #{_lambda_.23} parent=0 // pred_check
    _
  $region3: #{_lambda_.23} parent=0 // pred_check_branch
    %9 = sbr.rel (0) target = $region5
  $region4: #{_lambda_.23} parent=0 // pred_region
    _
  $region5: #{_lambda_.23} parent=0 // pred_fallthru
    _
  // Predicated region
  $region6: #{_lambda_.23} parent=0 // pred_check
    _
  $region7: #{_lambda_.23} parent=0 // pred_check_branch
    %11 = sbr.rel (0) target = $region9
  $region8: #{_lambda_.23} parent=0 // pred_region
    _
  $region9: #{_lambda_.23} parent=0 // pred_fallthru
    _
  // Predicated region
  $region10: #{_lambda_.23} parent=0 // pred_check
    _
  $region11: #{_lambda_.23} parent=0 // pred_check_branch
    %13 = sbr.rel (0) target = $region13
  $region12: #{_lambda_.23} parent=0 // pred_region
    _
  $region13: #{_lambda_.23} parent=0 // pred_fallthru
    _
  %v15 = vld [vmem:[%s0] sm:$0x1]
  %v16 = vld [vmem:[%s1] sm:$0xf]
  %v17 = vld [vmem:[%s1 + $0x4] sm:$0xf]
  %v18 = vld [vmem:[%s1 + $0x8] sm:$0xf]
  %v19 = vld [vmem:[%s1 + $0xc] sm:$0xf]
  %v20 = vld [vmem:[%s1 + $0x10] sm:$0xf]
  %v21 = vld [vmem:[%s1 + $0x14] sm:$0xf]
  %v22 = vld [vmem:[%s1 + $0x18] sm:$0xf]
  %v23 = vld [vmem:[%s1 + $0x1c] sm:$0xf]
  %v24 = vld [vmem:[%s1 + $0x20] sm:$0xf]
  %v25 = vld [vmem:[%s1 + $0x24] sm:$0xf]
  %v26 = vld [vmem:[%s1 + $0x28] sm:$0xf]
  %v27 = vld [vmem:[%s1 + $0x2c] sm:$0xf]
  %v28 = vld [vmem:[%s1 + $0x30] sm:$0xf]
  %v29 = vld [vmem:[%s1 + $0x34] sm:$0xf]
  %v30 = vld [vmem:[%s1 + $0x38] sm:$0xf]
  %v31 = vld [vmem:[%s1 + $0x3c] sm:$0xf]
  %v32 = vld [vmem:[%s2] sm:$0x1]
  %v34 = vlaneseq
  %v35 = vshrl.u32 %v34, 7
  %v36 = vsub.s32 0, %v35
  %v37 = vrot.slane %v32, %v36
  %v55 = vunpack.c.l.b16 %v16
  %v56 = vunpack.c.l.b16 %v17
  %v57 = vunpack.c.l.b16 %v18
  %v58 = vunpack.c.l.b16 %v19
  %v59 = vunpack.c.l.b16 %v20
  %v60 = vunpack.c.l.b16 %v21
  %v61 = vunpack.c.l.b16 %v22
  %v62 = vunpack.c.l.b16 %v23
  %v63 = vunpack.c.l.b16 %v24
  %v64 = vunpack.c.l.b16 %v25
  %v65 = vunpack.c.l.b16 %v26
  %v66 = vunpack.c.l.b16 %v27
  %v67 = vunpack.c.l.b16 %v28
  %v68 = vunpack.c.l.b16 %v29
  %v69 = vunpack.c.l.b16 %v30
  %v70 = vunpack.c.l.b16 %v31
  %v71 = vpack.c.b16 %v56, %v55
  %v72 = vpack.c.b16 %v58, %v57
  %v73 = vpack.c.b16 %v60, %v59
  %v74 = vpack.c.b16 %v62, %v61
  %v75 = vpack.c.b16 %v64, %v63
  %v76 = vpack.c.b16 %v66, %v65
  %v77 = vpack.c.b16 %v68, %v67
  %v78 = vpack.c.b16 %v70, %v69
  %87 = vmatprep.subr.bf16.mxu0 0
  %88 = vmatpush1.bf16.msra.mxu0 %v71
  %89 = vmatprep.subr.bf16.mxu0 0
  %90 = vmatpush1.bf16.msra.mxu0 %v72
  %91 = vmatprep.subr.bf16.mxu0 0
  %92 = vmatpush1.bf16.msra.mxu0 %v73
  %93 = vmatprep.subr.bf16.mxu0 0
  %94 = vmatpush1.bf16.msra.mxu0 %v74
  %95 = vmatprep.subr.bf16.mxu0 0
  %96 = vmatpush1.bf16.msra.mxu0 %v75
  %97 = vmatprep.subr.bf16.mxu0 0
  %98 = vmatpush1.bf16.msra.mxu0 %v76
  %99 = vmatprep.subr.bf16.mxu0 0
  %100 = vmatpush1.bf16.msra.mxu0 %v77
  %101 = vmatprep.subr.bf16.mxu0 0
  %102 = vmatpush1.bf16.msra.mxu0 %v78
  %103 = vmatprep.subr.bf16.mxu0 0
  %104 = vmatpush1.bf16.msra.mxu0 0
  %105 = vmatprep.subr.bf16.mxu0 0
  %106 = vmatpush1.bf16.msra.mxu0 0
  %107 = vmatprep.subr.bf16.mxu0 0
  %108 = vmatpush1.bf16.msra.mxu0 0
  %109 = vmatprep.subr.bf16.mxu0 0
  %110 = vmatpush1.bf16.msra.mxu0 0
  %111 = vmatprep.subr.bf16.mxu0 0
  %112 = vmatpush1.bf16.msra.mxu0 0
  %113 = vmatprep.subr.bf16.mxu0 0
  %114 = vmatpush1.bf16.msra.mxu0 0
  %115 = vmatprep.subr.bf16.mxu0 0
  %116 = vmatpush1.bf16.msra.mxu0 0
  %117 = vmatprep.subr.bf16.mxu0 0
  %118 = vmatpush1.bf16.msra.mxu0 0
  %119 = vmatprep.mubr.bf16.mxu0 0
  %120 = vmatmul.mubr.bf16.gmra.mrb[0].mxu0 %v15
  %v121 = vpop.f32.mrb[0].mxu0
  %v122 = vadd.f32 %v37, %v121
  %v123 = vpop.f32.mrb[0].mxu0
  %v124 = vpop.f32.mrb[0].mxu0
  %v125 = vpop.f32.mrb[0].mxu0
  %126 = vdwg.mxu0
  %v127 = vtanh.pop %v122
  %128 = vst [vmem:[%s3] sm:$0x3] %v127
  // Predicated region
  $region14: #{_lambda_.23} parent=0 // pred_check
    _
  $region15: #{_lambda_.23} parent=0 // pred_check_branch
    %130 = sbr.rel (0) target = $region17
  $region16: #{_lambda_.23} parent=0 // pred_region
    _
  $region17: #{_lambda_.23} parent=0 // pred_fallthru
    _
  // Predicated region
  $region18: #{_lambda_.23} parent=0 // pred_check
    _
  $region19: #{_lambda_.23} parent=0 // pred_check_branch
    %132 = sbr.rel (0) target = $region21
  $region20: #{_lambda_.23} parent=0 // pred_region
    _
  $region21: #{_lambda_.23} parent=0 // pred_fallthru
    _

// kernel: _lambda_.16
$region0: #{_lambda_.16}
  #allocation0 [shape = 'u32[]', space=smem, size = 0x4, offset = 0x4, fixed_abs, tag = 'smem constant byte address 0x4 - core index']
  #allocation1 [shape = 'u32[144,128]{1,0:T(1,128)}', space=vmem, size = 0x12000, scoped, tag = 'internal scratch']
  %s0 = inlined_call_operand.vmem [shape: bf16[16,128], index: 0, kind: input, shape index: {}]
  %s1 = inlined_call_operand.vmem [shape: bf16[128,256], index: 1, kind: input, shape index: {}]
  %s2 = inlined_call_operand.vmem [shape: f32[1,256], index: 2, kind: input, shape index: {}]
  %s3 = inlined_call_operand.vmem [shape: bf16[16,256], index: 3, kind: output, shape index: {}]
  %s4 = sld [smem:[#allocation0]]
  $region22: #{_lambda_.16} parent=0
    _
  %s6 = ssub.s32 1, %s4
  %s7 = scalar_select 0, %s6, %s4
  // Predicated region
  $region2: #{_lambda_.16} parent=0 // pred_check
    _
  $region3: #{_lambda_.16} parent=0 // pred_check_branch
    %9 = sbr.rel (0) target = $region5
  $region4: #{_lambda_.16} parent=0 // pred_region
    _
  $region5: #{_lambda_.16} parent=0 // pred_fallthru
    _
  // Predicated region
  $region6: #{_lambda_.16} parent=0 // pred_check
    _
  $region7: #{_lambda_.16} parent=0 // pred_check_branch
    %11 = sbr.rel (0) target = $region9
  $region8: #{_lambda_.16} parent=0 // pred_region
    _
  $region9: #{_lambda_.16} parent=0 // pred_fallthru
    _
  // Predicated region
  $region10: #{_lambda_.16} parent=0 // pred_check
    _
  $region11: #{_lambda_.16} parent=0 // pred_check_branch
    %13 = sbr.rel (0) target = $region13
  $region12: #{_lambda_.16} parent=0 // pred_region
    _
  $region13: #{_lambda_.16} parent=0 // pred_fallthru
    _
  %v15 = vld [vmem:[%s0] sm:$0xf]
  %v16 = vld [vmem:[%s0 + $0x4] sm:$0xf]
  %v17 = vld [vmem:[%s1] sm:$0xff]
  %v18 = vld [vmem:[%s1 + $0x8] sm:$0xff]
  %v19 = vld [vmem:[%s1 + $0x10] sm:$0xff]
  %v20 = vld [vmem:[%s1 + $0x18] sm:$0xff]
  %v21 = vld [vmem:[%s1 + $0x20] sm:$0xff]
  %v22 = vld [vmem:[%s1 + $0x28] sm:$0xff]
  %v23 = vld [vmem:[%s1 + $0x30] sm:$0xff]
  %v24 = vld [vmem:[%s1 + $0x38] sm:$0xff]
  %v25 = vld [vmem:[%s1 + $0x40] sm:$0xff]
  %v26 = vld [vmem:[%s1 + $0x48] sm:$0xff]
  %v27 = vld [vmem:[%s1 + $0x50] sm:$0xff]
  %v28 = vld [vmem:[%s1 + $0x58] sm:$0xff]
  %v29 = vld [vmem:[%s1 + $0x60] sm:$0xff]
  %v30 = vld [vmem:[%s1 + $0x68] sm:$0xff]
  %v31 = vld [vmem:[%s1 + $0x70] sm:$0xff]
  %v32 = vld [vmem:[%s1 + $0x78] sm:$0xff]
  %v33 = vld [vmem:[%s2] sm:$0x3]
  %v35 = vlaneseq
  %v36 = vshrl.u32 %v35, 7
  %v37 = vsub.s32 0, %v36
  %v38 = vrot.slane %v33, %v37
  %v39 = vlaneseq
  %v40 = vshrl.u32 %v39, 7
  %v41 = vsub.s32 1, %v40
  %v42 = vrot.slane %v33, %v41
  %v47 = vunpack.c.l.b16 %v15
  %v48 = vunpack.c.l.b16 %v16
  %v49 = vpack.c.b16 %v48, %v47
  %v67 = vunpack.c.l.b16 %v17
  %v68 = vunpack.c.h.b16 %v17
  %v69 = vunpack.c.l.b16 %v18
  %v70 = vunpack.c.h.b16 %v18
  %v71 = vunpack.c.l.b16 %v19
  %v72 = vunpack.c.h.b16 %v19
  %v73 = vunpack.c.l.b16 %v20
  %v74 = vunpack.c.h.b16 %v20
  %v75 = vunpack.c.l.b16 %v21
  %v76 = vunpack.c.h.b16 %v21
  %v77 = vunpack.c.l.b16 %v22
  %v78 = vunpack.c.h.b16 %v22
  %v79 = vunpack.c.l.b16 %v23
  %v80 = vunpack.c.h.b16 %v23
  %v81 = vunpack.c.l.b16 %v24
  %v82 = vunpack.c.h.b16 %v24
  %v83 = vunpack.c.l.b16 %v25
  %v84 = vunpack.c.h.b16 %v25
  %v85 = vunpack.c.l.b16 %v26
  %v86 = vunpack.c.h.b16 %v26
  %v87 = vunpack.c.l.b16 %v27
  %v88 = vunpack.c.h.b16 %v27
  %v89 = vunpack.c.l.b16 %v28
  %v90 = vunpack.c.h.b16 %v28
  %v91 = vunpack.c.l.b16 %v29
  %v92 = vunpack.c.h.b16 %v29
  %v93 = vunpack.c.l.b16 %v30
  %v94 = vunpack.c.h.b16 %v30
  %v95 = vunpack.c.l.b16 %v31
  %v96 = vunpack.c.h.b16 %v31
  %v97 = vunpack.c.l.b16 %v32
  %v98 = vunpack.c.h.b16 %v32
  %v99 = vpack.c.b16 %v69, %v67
  %v100 = vpack.c.b16 %v70, %v68
  %v101 = vpack.c.b16 %v73, %v71
  %v102 = vpack.c.b16 %v74, %v72
  %v103 = vpack.c.b16 %v77, %v75
  %v104 = vpack.c.b16 %v78, %v76
  %v105 = vpack.c.b16 %v81, %v79
  %v106 = vpack.c.b16 %v82, %v80
  %v107 = vpack.c.b16 %v85, %v83
  %v108 = vpack.c.b16 %v86, %v84
  %v109 = vpack.c.b16 %v89, %v87
  %v110 = vpack.c.b16 %v90, %v88
  %v111 = vpack.c.b16 %v93, %v91
  %v112 = vpack.c.b16 %v94, %v92
  %v113 = vpack.c.b16 %v97, %v95
  %v114 = vpack.c.b16 %v98, %v96
  %131 = vmatprep.subr.bf16.mxu0 %v100
  %132 = vmatpush1.bf16.msra.mxu0 %v99
  %133 = vmatprep.subr.bf16.mxu0 %v102
  %134 = vmatpush1.bf16.msra.mxu0 %v101
  %135 = vmatprep.subr.bf16.mxu0 %v104
  %136 = vmatpush1.bf16.msra.mxu0 %v103
  %137 = vmatprep.subr.bf16.mxu0 %v106
  %138 = vmatpush1.bf16.msra.mxu0 %v105
  %139 = vmatprep.subr.bf16.mxu0 %v108
  %140 = vmatpush1.bf16.msra.mxu0 %v107
  %141 = vmatprep.subr.bf16.mxu0 %v110
  %142 = vmatpush1.bf16.msra.mxu0 %v109
  %143 = vmatprep.subr.bf16.mxu0 %v112
  %144 = vmatpush1.bf16.msra.mxu0 %v111
  %145 = vmatprep.subr.bf16.mxu0 %v114
  %146 = vmatpush1.bf16.msra.mxu0 %v113
  %147 = vmatprep.subr.bf16.mxu0 0
  %148 = vmatpush1.bf16.msra.mxu0 0
  %149 = vmatprep.subr.bf16.mxu0 0
  %150 = vmatpush1.bf16.msra.mxu0 0
  %151 = vmatprep.subr.bf16.mxu0 0
  %152 = vmatpush1.bf16.msra.mxu0 0
  %153 = vmatprep.subr.bf16.mxu0 0
  %154 = vmatpush1.bf16.msra.mxu0 0
  %155 = vmatprep.subr.bf16.mxu0 0
  %156 = vmatpush1.bf16.msra.mxu0 0
  %157 = vmatprep.subr.bf16.mxu0 0
  %158 = vmatpush1.bf16.msra.mxu0 0
  %159 = vmatprep.subr.bf16.mxu0 0
  %160 = vmatpush1.bf16.msra.mxu0 0
  %161 = vmatprep.subr.bf16.mxu0 0
  %162 = vmatpush1.bf16.msra.mxu0 0
  %163 = vmatprep.mubr.bf16.mxu0 0
  %164 = vmatmul.mubr.bf16.gmra.mrb[0].mxu0 %v49
  %v165 = vpop.f32.mrb[0].mxu0
  %v166 = vadd.f32 %v38, %v165
  %v167 = vpop.f32.mrb[0].mxu0
  %v168 = vadd.f32 %v42, %v167
  %v169 = vpop.f32.mrb[0].mxu0
  %v170 = vadd.f32 %v38, %v169
  %v171 = vpop.f32.mrb[0].mxu0
  %v172 = vadd.f32 %v42, %v171
  %173 = vdwg.mxu0
  %v174 = vmul.f32 %v166, %v166
  %v175 = vmul.f32 %v168, %v168
  %v176 = vmul.f32 %v170, %v170
  %v177 = vmul.f32 %v172, %v172
  %v178 = vmul.f32 %v166, %v174
  %v179 = vmul.f32 %v168, %v175
  %v180 = vmul.f32 %v170, %v176
  %v181 = vmul.f32 %v172, %v177
  %v182 = vmul.f32 %v178, 0.044715
  %v183 = vmul.f32 %v179, 0.044715
  %v184 = vmul.f32 %v180, 0.044715
  %v185 = vmul.f32 %v181, 0.044715
  %v186 = vadd.f32 %v166, %v182
  %v187 = vadd.f32 %v168, %v183
  %v188 = vadd.f32 %v170, %v184
  %v189 = vadd.f32 %v172, %v185
  %v190 = vmul.f32 %v186, 0.7978846
  %v191 = vmul.f32 %v187, 0.7978846
  %v192 = vmul.f32 %v188, 0.7978846
  %v193 = vmul.f32 %v189, 0.7978846
  %v194 = vtanh.pop %v190
  %v195 = vtanh.pop %v191
  %v196 = vtanh.pop %v192
  %v197 = vtanh.pop %v193
  %v198 = vadd.f32 %v194, 1.0
  %v199 = vadd.f32 %v195, 1.0
  %v200 = vadd.f32 %v196, 1.0
  %v201 = vadd.f32 %v197, 1.0
  %v202 = vmul.f32 %v198, 0.5
  %v203 = vmul.f32 %v199, 0.5
  %v204 = vmul.f32 %v200, 0.5
  %v205 = vmul.f32 %v201, 0.5
  %v206 = vmul.f32 %v166, %v202
  %v207 = vmul.f32 %v168, %v203
  %v208 = vmul.f32 %v170, %v204
  %v209 = vmul.f32 %v172, %v205
  %v210 = vpack.c.bf16 %v208, %v206
  %v211 = vpack.c.bf16 %v209, %v207
  %v214 = vunpack.c.l.b16 %v210
  %v215 = vunpack.c.l.b16 %v211
  %v216 = vunpack.c.h.b16 %v210
  %v217 = vunpack.c.h.b16 %v211
  %v218 = vpack.c.b16 %v215, %v214
  %v219 = vpack.c.b16 %v217, %v216
  %222 = vst [vmem:[%s3] sm:$0xff] %v218
  %223 = vst [vmem:[%s3 + $0x8] sm:$0xff] %v219
  // Predicated region
  $region14: #{_lambda_.16} parent=0 // pred_check
    _
  $region15: #{_lambda_.16} parent=0 // pred_check_branch
    %225 = sbr.rel (0) target = $region17
  $region16: #{_lambda_.16} parent=0 // pred_region
    _
  $region17: #{_lambda_.16} parent=0 // pred_fallthru
    _
  // Predicated region
  $region18: #{_lambda_.16} parent=0 // pred_check
    _
  $region19: #{_lambda_.16} parent=0 // pred_check_branch
    %227 = sbr.rel (0) target = $region21
  $region20: #{_lambda_.16} parent=0 // pred_region
    _
  $region21: #{_lambda_.16} parent=0 // pred_fallthru
    _

</llo_original>
